<compile_context>
chip_gen: v6e
topology: v6e:2x2x1
jax: 0.10.0
libtpu: 0.0.40
codegen_flags: <defaults>
</compile_context>

<pallas_src>
import jax
import jax.numpy as jnp
from jax.experimental import pallas as pl
from jax.experimental.pallas import tpu as pltpu

_LANE = 128  # pad the final output feature dim to a multiple of this


def _mlp_fused_kernel(x_ref, w1_ref, b1_ref, w2_ref, b2_ref, w3_ref, b3_ref,
                      w4_ref, b4_ref, o_ref):
    # Layer 1: (B, F) @ (F, 1024) + b1, ReLU
    h = jnp.dot(x_ref[...], w1_ref[...], preferred_element_type=jnp.float32)
    h = jnp.maximum(h + b1_ref[...], 0.0)
    # Layer 2: (B, 1024) @ (1024, 512) + b2, ReLU
    h = jnp.dot(h, w2_ref[...], preferred_element_type=jnp.float32)
    h = jnp.maximum(h + b2_ref[...], 0.0)
    # Layer 3: (B, 512) @ (512, 256) + b3, ReLU
    h = jnp.dot(h, w3_ref[...], preferred_element_type=jnp.float32)
    h = jnp.maximum(h + b3_ref[...], 0.0)
    # Layer 4 (no ReLU), output is lane-dense (padded to a multiple of 128)
    out = jnp.dot(h, w4_ref[...], preferred_element_type=jnp.float32) + b4_ref[...]
    o_ref[...] = out.astype(o_ref.dtype)


def multitask1_forward_pallas(params, x):
    """Fused forward: one pallas_call, everything resident in VMEM."""
    w1, b1 = params["l1"]
    w2, b2 = params["l2"]
    w3, b3 = params["l3"]
    w4, b4 = params["l4"]

    B, F = x.shape
    nu_tasks = w4.shape[1]
    n_pad = ((nu_tasks + _LANE - 1) // _LANE) * _LANE

    # Zero-pad the last layer's output dim so the final store is lane-dense.
    w4p = jnp.zeros((w4.shape[0], n_pad), w4.dtype).at[:, :nu_tasks].set(w4)
    b4p = jnp.zeros((1, n_pad), b4.dtype).at[0, :nu_tasks].set(b4)

    vmem = pl.BlockSpec(memory_space=pltpu.MemorySpace.VMEM)
    out_padded = pl.pallas_call(
        _mlp_fused_kernel,
        out_shape=jax.ShapeDtypeStruct((B, n_pad), x.dtype),
        in_specs=[vmem] * 9,
        out_specs=vmem,
    )(
        x,
        w1, b1.reshape(1, -1),
        w2, b2.reshape(1, -1),
        w3, b3.reshape(1, -1),
        w4p, b4p,
    )
    return out_padded[:, :nu_tasks]


def init_linear_params(key, in_features, out_features):
    # PyTorch nn.Linear default init: U(-1/sqrt(in), 1/sqrt(in)) for weight and bias.
    kw, kb = jax.random.split(key)
    bound = 1.0 / jnp.sqrt(jnp.float32(in_features))
    # stored as (in, out) so forward is x @ W + b
    w = jax.random.uniform(kw, (in_features, out_features), jnp.float32, -bound, bound)
    b = jax.random.uniform(kb, (out_features,), jnp.float32, -bound, bound)
    return w, b


def multitask1_init(key, nu_features, nu_tasks):
    k1, k2, k3, k4 = jax.random.split(key, 4)
    return {
        "l1": init_linear_params(k1, nu_features, 1024),
        "l2": init_linear_params(k2, 1024, 512),
        "l3": init_linear_params(k3, 512, 256),
        "l4": init_linear_params(k4, 256, nu_tasks),
    }


@jax.jit
def multitask1_forward(params, x):
    return multitask1_forward_pallas(params, x)


def _reference_forward(params, x):
    h = jnp.maximum(x @ params["l1"][0] + params["l1"][1], 0.0)
    h = jnp.maximum(h @ params["l2"][0] + params["l2"][1], 0.0)
    h = jnp.maximum(h @ params["l3"][0] + params["l3"][1], 0.0)
    return h @ params["l4"][0] + params["l4"][1]


if __name__ == "__main__":
    key = jax.random.PRNGKey(0)
    k_params, k_x = jax.random.split(key)

    batch = 8
    nu_features = 32
    nu_tasks = 8

    params = multitask1_init(k_params, nu_features, nu_tasks)
    x = jax.random.normal(k_x, (batch, nu_features), dtype=jnp.float32)

    y = multitask1_forward(params, x)
    jax.block_until_ready(y)

    y_ref = _reference_forward(params, x)
    assert y.shape == (batch, nu_tasks)
    assert jnp.allclose(y, y_ref, atol=1e-4, rtol=1e-4)

    print("KERNEL_OK")
</pallas_src>

<mosaic_0001>
module attributes {stable_mosaic.version = 11 : i64} {
  func.func @_mlp_fused_kernel(%arg0: memref<8x32xf32, #tpu.memory_space<vmem>>, %arg1: memref<32x1024xf32, #tpu.memory_space<vmem>>, %arg2: memref<1x1024xf32, #tpu.memory_space<vmem>>, %arg3: memref<1024x512xf32, #tpu.memory_space<vmem>>, %arg4: memref<1x512xf32, #tpu.memory_space<vmem>>, %arg5: memref<512x256xf32, #tpu.memory_space<vmem>>, %arg6: memref<1x256xf32, #tpu.memory_space<vmem>>, %arg7: memref<256x128xf32, #tpu.memory_space<vmem>>, %arg8: memref<1x128xf32, #tpu.memory_space<vmem>>, %arg9: memref<8x128xf32, #tpu.memory_space<vmem>>) attributes {dimension_semantics = [], scalar_prefetch = 0 : i64, scratch_operands = 0 : i64, tpu.core_type = #tpu.core_type<tc>} {
    %c0 = arith.constant 0 : index
    %c0_0 = arith.constant 0 : index
    %0 = vector.load %arg0[%c0, %c0_0] : memref<8x32xf32, #tpu.memory_space<vmem>>, vector<8x32xf32>
    %c0_1 = arith.constant 0 : index
    %c0_2 = arith.constant 0 : index
    %1 = vector.load %arg1[%c0_1, %c0_2] : memref<32x1024xf32, #tpu.memory_space<vmem>>, vector<32x1024xf32>
    %cst = arith.constant dense<0.000000e+00> : vector<8x1024xf32>
    %2 = tpu.matmul %0, %1, %cst {dimension_numbers = #tpu.dot_dimension_numbers<[1], [0], [0], [1], [0, 0, 1, 1], [], []>} : vector<8x32xf32>, vector<32x1024xf32>, vector<8x1024xf32> -> vector<8x1024xf32>
    %c0_3 = arith.constant 0 : index
    %c0_4 = arith.constant 0 : index
    %3 = vector.load %arg2[%c0_3, %c0_4] : memref<1x1024xf32, #tpu.memory_space<vmem>>, vector<1x1024xf32>
    %4 = vector.broadcast %3 : vector<1x1024xf32> to vector<8x1024xf32>
    %5 = arith.addf %2, %4 : vector<8x1024xf32>
    %cst_5 = arith.constant 0.000000e+00 : f32
    %6 = vector.broadcast %cst_5 : f32 to vector<8x1024xf32>
    %7 = arith.maximumf %5, %6 : vector<8x1024xf32>
    %c0_6 = arith.constant 0 : index
    %c0_7 = arith.constant 0 : index
    %8 = vector.load %arg3[%c0_6, %c0_7] : memref<1024x512xf32, #tpu.memory_space<vmem>>, vector<1024x512xf32>
    %cst_8 = arith.constant dense<0.000000e+00> : vector<8x512xf32>
    %9 = tpu.matmul %7, %8, %cst_8 {dimension_numbers = #tpu.dot_dimension_numbers<[1], [0], [0], [1], [0, 0, 1, 1], [], []>} : vector<8x1024xf32>, vector<1024x512xf32>, vector<8x512xf32> -> vector<8x512xf32>
    %c0_9 = arith.constant 0 : index
    %c0_10 = arith.constant 0 : index
    %10 = vector.load %arg4[%c0_9, %c0_10] : memref<1x512xf32, #tpu.memory_space<vmem>>, vector<1x512xf32>
    %11 = vector.broadcast %10 : vector<1x512xf32> to vector<8x512xf32>
    %12 = arith.addf %9, %11 : vector<8x512xf32>
    %cst_11 = arith.constant 0.000000e+00 : f32
    %13 = vector.broadcast %cst_11 : f32 to vector<8x512xf32>
    %14 = arith.maximumf %12, %13 : vector<8x512xf32>
    %c0_12 = arith.constant 0 : index
    %c0_13 = arith.constant 0 : index
    %15 = vector.load %arg5[%c0_12, %c0_13] : memref<512x256xf32, #tpu.memory_space<vmem>>, vector<512x256xf32>
    %cst_14 = arith.constant dense<0.000000e+00> : vector<8x256xf32>
    %16 = tpu.matmul %14, %15, %cst_14 {dimension_numbers = #tpu.dot_dimension_numbers<[1], [0], [0], [1], [0, 0, 1, 1], [], []>} : vector<8x512xf32>, vector<512x256xf32>, vector<8x256xf32> -> vector<8x256xf32>
    %c0_15 = arith.constant 0 : index
    %c0_16 = arith.constant 0 : index
    %17 = vector.load %arg6[%c0_15, %c0_16] : memref<1x256xf32, #tpu.memory_space<vmem>>, vector<1x256xf32>
    %18 = vector.broadcast %17 : vector<1x256xf32> to vector<8x256xf32>
    %19 = arith.addf %16, %18 : vector<8x256xf32>
    %cst_17 = arith.constant 0.000000e+00 : f32
    %20 = vector.broadcast %cst_17 : f32 to vector<8x256xf32>
    %21 = arith.maximumf %19, %20 : vector<8x256xf32>
    %c0_18 = arith.constant 0 : index
    %c0_19 = arith.constant 0 : index
    %22 = vector.load %arg7[%c0_18, %c0_19] : memref<256x128xf32, #tpu.memory_space<vmem>>, vector<256x128xf32>
    %cst_20 = arith.constant dense<0.000000e+00> : vector<8x128xf32>
    %23 = tpu.matmul %21, %22, %cst_20 {dimension_numbers = #tpu.dot_dimension_numbers<[1], [0], [0], [1], [0, 0, 1, 1], [], []>} : vector<8x256xf32>, vector<256x128xf32>, vector<8x128xf32> -> vector<8x128xf32>
    %c0_21 = arith.constant 0 : index
    %c0_22 = arith.constant 0 : index
    %24 = vector.load %arg8[%c0_21, %c0_22] : memref<1x128xf32, #tpu.memory_space<vmem>>, vector<1x128xf32>
    %25 = vector.broadcast %24 : vector<1x128xf32> to vector<8x128xf32>
    %26 = arith.addf %23, %25 : vector<8x128xf32>
    %c0_23 = arith.constant 0 : index
    %c0_24 = arith.constant 0 : index
    %27 = vector.load %arg9[%c0_23, %c0_24] : memref<8x128xf32, #tpu.memory_space<vmem>>, vector<8x128xf32>
    tpu.vector_store %arg9[%c0_23, %c0_24], %26 {strides = array<i32>} : memref<8x128xf32, #tpu.memory_space<vmem>>, vector<8x128xf32>,
    return
  }
}

</mosaic_0001>

<llo_original>
// kernel: multitask1_forward.1
$region0: #{multitask1_forward.1}
  #allocation0 [shape = 'u32[]', space=smem, size = 0x4, offset = 0x4, fixed_abs, tag = 'smem constant byte address 0x4 - core index']
  #allocation1 [shape = 'u32[144,128]{1,0:T(1,128)}', space=vmem, size = 0x12000, scoped, tag = 'internal scratch']
  %s0 = inlined_call_operand.hbm [shape: f32[8,32], index: 0, kind: input, shape index: {}]
  %s1 = inlined_call_operand.hbm [shape: f32[32,1024], index: 1, kind: input, shape index: {}]
  %s2 = inlined_call_operand.hbm [shape: f32[1,1024], index: 2, kind: input, shape index: {}]
  %s3 = inlined_call_operand.hbm [shape: f32[1024,512], index: 3, kind: input, shape index: {}]
  %s4 = inlined_call_operand.hbm [shape: f32[1,512], index: 4, kind: input, shape index: {}]
  %s5 = inlined_call_operand.hbm [shape: f32[512,256], index: 5, kind: input, shape index: {}]
  %s6 = inlined_call_operand.hbm [shape: f32[1,256], index: 6, kind: input, shape index: {}]
  %s7 = inlined_call_operand.vmem [shape: f32[256,128], index: 7, kind: input, shape index: {}]
  %s8 = inlined_call_operand.vmem [shape: f32[1,128], index: 8, kind: input, shape index: {}]
  %s9 = inlined_call_operand.hbm [shape: f32[8,128], index: 9, kind: output, shape index: {}]
  %s10 = sld [smem:[#allocation0]]
  $region74: #{multitask1_forward.1} parent=0
    _
  %s12 = ssub.s32 1, %s10
  %s13 = scalar_select 0, %s12, %s10
  $region1: #{multitask1_forward.1} parent=0
    #allocation2 [shape = 'u8[4096]{0}', space=vmem, size = 0x1000, scoped, tag = 'input window, operand 0, single buffered']
    #allocation3 [shape = 's32[1]{0}', space=sflag, size = 0x4, scoped, tag = 'scoped memory for multitask1_forward.1']
    #allocation4 [shape = 's32[1]{0}', space=sflag, size = 0x4, scoped, tag = 'scoped memory for multitask1_forward.1']
    #allocation5 [shape = 'u8[131072]{0}', space=vmem, size = 0x20000, scoped, tag = 'input window, operand 1, single buffered']
    #allocation6 [shape = 's32[1]{0}', space=sflag, size = 0x4, scoped, tag = 'scoped memory for multitask1_forward.1']
    #allocation7 [shape = 'u8[4096]{0}', space=vmem, size = 0x1000, scoped, tag = 'input window, operand 2, single buffered']
    #allocation8 [shape = 'u8[2097152]{0}', space=vmem, size = 0x200000, scoped, tag = 'input window, operand 3, single buffered']
    #allocation9 [shape = 's32[1]{0}', space=sflag, size = 0x4, scoped, tag = 'scoped memory for multitask1_forward.1']
    #allocation10 [shape = 'u8[2048]{0}', space=vmem, size = 0x800, scoped, tag = 'input window, operand 4, single buffered']
    #allocation11 [shape = 'u8[524288]{0}', space=vmem, size = 0x80000, scoped, tag = 'input window, operand 5, single buffered']
    #allocation12 [shape = 's32[1]{0}', space=sflag, size = 0x4, scoped, tag = 'scoped memory for multitask1_forward.1']
    #allocation13 [shape = 'u8[1024]{0}', space=vmem, size = 0x400, scoped, tag = 'input window, operand 6, single buffered']
    #allocation14 [shape = 'u8[4096]{0}', space=vmem, size = 0x1000, scoped, tag = 'output window, operand 0, single buffered']
    %14 = vsyncpa [#allocation3], 0
    %15 = vsyncpa [#allocation6], 0
    %16 = vsyncpa [#allocation9], 0
    %17 = vsyncpa [#allocation12], 0
    %18 = vsyncpa [#allocation4], 0
    // Predicated region
    $region2: #{multitask1_forward.1} parent=1 // pred_check
      _
    $region3: #{multitask1_forward.1} parent=1 // pred_check_branch
      %20 = sbr.rel (0) target = $region5
    $region4: #{multitask1_forward.1} parent=1 // pred_region
      %s22 = ssub.s32 128, 128
      %23 = vsyncadd [#allocation3], %s22
      %s25 = sshll.u32 [#allocation2], 4
      %s26 = int_to_ptr.vmem [resolvable:$true] %s25
      %28 = dma.hbm_to_vmem [thread:$0]  %s0, 128, %s26, [#allocation3]
    $region5: #{multitask1_forward.1} parent=1 // pred_fallthru
      _
    // Predicated region
    $region6: #{multitask1_forward.1} parent=1 // pred_check
      _
    $region7: #{multitask1_forward.1} parent=1 // pred_check_branch
      %30 = sbr.rel (0) target = $region9
    $region8: #{multitask1_forward.1} parent=1 // pred_region
      %s32 = ssub.s32 4096, 4096
      %33 = vsyncadd [#allocation6], %s32
      %s34 = sshll.u32 [#allocation5], 4
      %s35 = int_to_ptr.vmem [resolvable:$true] %s34
      %40 = dma.hbm_to_vmem [thread:$0]  %s1, 4096, %s35, [#allocation6], 1024, 1024, 64
    $region9: #{multitask1_forward.1} parent=1 // pred_fallthru
      _
    // Predicated region
    $region10: #{multitask1_forward.1} parent=1 // pred_check
      _
    $region11: #{multitask1_forward.1} parent=1 // pred_check_branch
      %42 = sbr.rel (0) target = $region13
    $region12: #{multitask1_forward.1} parent=1 // pred_region
      %s44 = ssub.s32 128, 128
      %45 = vsyncadd [#allocation6], %s44
      %s47 = sshll.u32 [#allocation7], 4
      %s48 = int_to_ptr.vmem [resolvable:$true] %s47
      %50 = dma.hbm_to_vmem [thread:$0]  %s2, 128, %s48, [#allocation6]
    $region13: #{multitask1_forward.1} parent=1 // pred_fallthru
      _
    // Predicated region
    $region14: #{multitask1_forward.1} parent=1 // pred_check
      _
    $region15: #{multitask1_forward.1} parent=1 // pred_check_branch
      %52 = sbr.rel (0) target = $region17
    $region16: #{multitask1_forward.1} parent=1 // pred_region
      %s54 = ssub.s32 65536, 65536
      %55 = vsyncadd [#allocation9], %s54
      %s56 = sshll.u32 [#allocation8], 4
      %s57 = int_to_ptr.vmem [resolvable:$true] %s56
      %62 = dma.hbm_to_vmem [thread:$0]  %s3, 65536, %s57, [#allocation9], 512, 512, 32
    $region17: #{multitask1_forward.1} parent=1 // pred_fallthru
      _
    // Predicated region
    $region18: #{multitask1_forward.1} parent=1 // pred_check
      _
    $region19: #{multitask1_forward.1} parent=1 // pred_check_branch
      %64 = sbr.rel (0) target = $region21
    $region20: #{multitask1_forward.1} parent=1 // pred_region
      %s66 = ssub.s32 64, 64
      %67 = vsyncadd [#allocation9], %s66
      %s69 = sshll.u32 [#allocation10], 4
      %s70 = int_to_ptr.vmem [resolvable:$true] %s69
      %72 = dma.hbm_to_vmem [thread:$0]  %s4, 64, %s70, [#allocation9]
    $region21: #{multitask1_forward.1} parent=1 // pred_fallthru
      _
    // Predicated region
    $region22: #{multitask1_forward.1} parent=1 // pred_check
      _
    $region23: #{multitask1_forward.1} parent=1 // pred_check_branch
      %74 = sbr.rel (0) target = $region25
    $region24: #{multitask1_forward.1} parent=1 // pred_region
      %s76 = ssub.s32 16384, 16384
      %77 = vsyncadd [#allocation12], %s76
      %s78 = sshll.u32 [#allocation11], 4
      %s79 = int_to_ptr.vmem [resolvable:$true] %s78
      %84 = dma.hbm_to_vmem [thread:$0]  %s5, 16384, %s79, [#allocation12], 256, 256, 16
    $region25: #{multitask1_forward.1} parent=1 // pred_fallthru
      _
    // Predicated region
    $region26: #{multitask1_forward.1} parent=1 // pred_check
      _
    $region27: #{multitask1_forward.1} parent=1 // pred_check_branch
      %86 = sbr.rel (0) target = $region29
    $region28: #{multitask1_forward.1} parent=1 // pred_region
      %s88 = ssub.s32 32, 32
      %89 = vsyncadd [#allocation12], %s88
      %s91 = sshll.u32 [#allocation13], 4
      %s92 = int_to_ptr.vmem [resolvable:$true] %s91
      %94 = dma.hbm_to_vmem [thread:$0]  %s6, 32, %s92, [#allocation12]
    $region29: #{multitask1_forward.1} parent=1 // pred_fallthru
      _
    // Predicated region
    $region30: #{multitask1_forward.1} parent=1 // pred_check
      _
    $region31: #{multitask1_forward.1} parent=1 // pred_check_branch
      %96 = sbr.rel (0) target = $region33
    $region32: #{multitask1_forward.1} parent=1 // pred_region
      _
    $region33: #{multitask1_forward.1} parent=1 // pred_fallthru
      _
    // Predicated region
    $region34: #{multitask1_forward.1} parent=1 // pred_check
      _
    $region35: #{multitask1_forward.1} parent=1 // pred_check_branch
      %98 = sbr.rel (0) target = $region37
    $region36: #{multitask1_forward.1} parent=1 // pred_region
      _
    $region37: #{multitask1_forward.1} parent=1 // pred_fallthru
      _
    // Predicated region
    $region38: #{multitask1_forward.1} parent=1 // pred_check
      _
    $region39: #{multitask1_forward.1} parent=1 // pred_check_branch
      %100 = sbr.rel (0) target = $region41
    $region40: #{multitask1_forward.1} parent=1 // pred_region
      %101 = dma.done [#allocation3], 128
    $region41: #{multitask1_forward.1} parent=1 // pred_fallthru
      _
    // Predicated region
    $region42: #{multitask1_forward.1} parent=1 // pred_check
      _
    $region43: #{multitask1_forward.1} parent=1 // pred_check_branch
      %103 = sbr.rel (0) target = $region45
    $region44: #{multitask1_forward.1} parent=1 // pred_region
      %104 = dma.done [#allocation6], 4096
    $region45: #{multitask1_forward.1} parent=1 // pred_fallthru
      _
    // Predicated region
    $region46: #{multitask1_forward.1} parent=1 // pred_check
      _
    $region47: #{multitask1_forward.1} parent=1 // pred_check_branch
      %106 = sbr.rel (0) target = $region49
    $region48: #{multitask1_forward.1} parent=1 // pred_region
      %107 = dma.done [#allocation6], 128
    $region49: #{multitask1_forward.1} parent=1 // pred_fallthru
      _
    // Predicated region
    $region50: #{multitask1_forward.1} parent=1 // pred_check
      _
    $region51: #{multitask1_forward.1} parent=1 // pred_check_branch
      %109 = sbr.rel (0) target = $region53
    $region52: #{multitask1_forward.1} parent=1 // pred_region
      %110 = dma.done [#allocation9], 65536
    $region53: #{multitask1_forward.1} parent=1 // pred_fallthru
      _
    // Predicated region
    $region54: #{multitask1_forward.1} parent=1 // pred_check
      _
    $region55: #{multitask1_forward.1} parent=1 // pred_check_branch
      %112 = sbr.rel (0) target = $region57
    $region56: #{multitask1_forward.1} parent=1 // pred_region
      %113 = dma.done [#allocation9], 64
    $region57: #{multitask1_forward.1} parent=1 // pred_fallthru
      _
    // Predicated region
    $region58: #{multitask1_forward.1} parent=1 // pred_check
      _
    $region59: #{multitask1_forward.1} parent=1 // pred_check_branch
      %115 = sbr.rel (0) target = $region61
    $region60: #{multitask1_forward.1} parent=1 // pred_region
      %116 = dma.done [#allocation12], 16384
    $region61: #{multitask1_forward.1} parent=1 // pred_fallthru
      _
    // Predicated region
    $region62: #{multitask1_forward.1} parent=1 // pred_check
      _
    $region63: #{multitask1_forward.1} parent=1 // pred_check_branch
      %118 = sbr.rel (0) target = $region65
    $region64: #{multitask1_forward.1} parent=1 // pred_region
      %119 = dma.done [#allocation12], 32
    $region65: #{multitask1_forward.1} parent=1 // pred_fallthru
      _
    %v120 = vld [vmem:[#allocation2] sm:$0xff]
    %v121 = vld [vmem:[#allocation5] sm:$0xff]
    %v122 = vld [vmem:[#allocation5 + $0x8] sm:$0xff]
    %v123 = vld [vmem:[#allocation5 + $0x10] sm:$0xff]
    %v124 = vld [vmem:[#allocation5 + $0x18] sm:$0xff]
    %v125 = vld [vmem:[#allocation5 + $0x20] sm:$0xff]
    %v126 = vld [vmem:[#allocation5 + $0x28] sm:$0xff]
    %v127 = vld [vmem:[#allocation5 + $0x30] sm:$0xff]
    %v128 = vld [vmem:[#allocation5 + $0x38] sm:$0xff]
    %v129 = vld [vmem:[#allocation5 + $0x40] sm:$0xff]
    %v130 = vld [vmem:[#allocation5 + $0x48] sm:$0xff]
    %v131 = vld [vmem:[#allocation5 + $0x50] sm:$0xff]
    %v132 = vld [vmem:[#allocation5 + $0x58] sm:$0xff]
    %v133 = vld [vmem:[#allocation5 + $0x60] sm:$0xff]
    %v134 = vld [vmem:[#allocation5 + $0x68] sm:$0xff]
    %v135 = vld [vmem:[#allocation5 + $0x70] sm:$0xff]
    %v136 = vld [vmem:[#allocation5 + $0x78] sm:$0xff]
    %v137 = vld [vmem:[#allocation5 + $0x80] sm:$0xff]
    %v138 = vld [vmem:[#allocation5 + $0x88] sm:$0xff]
    %v139 = vld [vmem:[#allocation5 + $0x90] sm:$0xff]
    %v140 = vld [vmem:[#allocation5 + $0x98] sm:$0xff]
    %v141 = vld [vmem:[#allocation5 + $0xa0] sm:$0xff]
    %v142 = vld [vmem:[#allocation5 + $0xa8] sm:$0xff]
    %v143 = vld [vmem:[#allocation5 + $0xb0] sm:$0xff]
    %v144 = vld [vmem:[#allocation5 + $0xb8] sm:$0xff]
    %v145 = vld [vmem:[#allocation5 + $0xc0] sm:$0xff]
    %v146 = vld [vmem:[#allocation5 + $0xc8] sm:$0xff]
    %v147 = vld [vmem:[#allocation5 + $0xd0] sm:$0xff]
    %v148 = vld [vmem:[#allocation5 + $0xd8] sm:$0xff]
    %v149 = vld [vmem:[#allocation5 + $0xe0] sm:$0xff]
    %v150 = vld [vmem:[#allocation5 + $0xe8] sm:$0xff]
    %v151 = vld [vmem:[#allocation5 + $0xf0] sm:$0xff]
    %v152 = vld [vmem:[#allocation5 + $0xf8] sm:$0xff]
    %v153 = vld [vmem:[#allocation7] sm:$0xff]
    %v155 = vlaneseq
    %v156 = vshrl.u32 %v155, 7
    %v157 = vsub.s32 0, %v156
    %v158 = vrot.slane %v153, %v157
    %v159 = vlaneseq
    %v160 = vshrl.u32 %v159, 7
    %v161 = vsub.s32 1, %v160
    %v162 = vrot.slane %v153, %v161
    %v163 = vlaneseq
    %v164 = vshrl.u32 %v163, 7
    %v165 = vsub.s32 2, %v164
    %v166 = vrot.slane %v153, %v165
    %v167 = vlaneseq
    %v168 = vshrl.u32 %v167, 7
    %v169 = vsub.s32 3, %v168
    %v170 = vrot.slane %v153, %v169
    %v171 = vlaneseq
    %v172 = vshrl.u32 %v171, 7
    %v173 = vsub.s32 4, %v172
    %v174 = vrot.slane %v153, %v173
    %v175 = vlaneseq
    %v176 = vshrl.u32 %v175, 7
    %v177 = vsub.s32 5, %v176
    %v178 = vrot.slane %v153, %v177
    %v179 = vlaneseq
    %v180 = vshrl.u32 %v179, 7
    %v181 = vsub.s32 6, %v180
    %v182 = vrot.slane %v153, %v181
    %v183 = vlaneseq
    %v184 = vshrl.u32 %v183, 7
    %v185 = vsub.s32 7, %v184
    %v186 = vrot.slane %v153, %v185
    %vm195 = vcmask 261120
    %v197 = vsel %vm195, %v120, 0
    %199 = vmatprep.subr.mxu0 0.0
    %200 = vmatpush1.msra.mxu0 0.0
    %201 = vmatprep.subr.mxu0 0.0
    %202 = vmatpush1.msra.mxu0 0.0
    %203 = vmatprep.subr.mxu0 0.0
    %204 = vmatpush1.msra.mxu0 0.0
    %205 = vmatprep.subr.mxu0 0.0
    %206 = vmatpush1.msra.mxu0 0.0
    %207 = vmatprep.subr.mxu0 0.0
    %208 = vmatpush1.msra.mxu0 0.0
    %209 = vmatprep.subr.mxu0 0.0
    %210 = vmatpush1.msra.mxu0 0.0
    %211 = vmatprep.subr.mxu0 0.0
    %212 = vmatpush1.msra.mxu0 0.0
    %213 = vmatprep.subr.mxu0 0.0
    %214 = vmatpush1.msra.mxu0 0.0
    %215 = vmatprep.subr.mxu0 0.0
    %216 = vmatpush1.msra.mxu0 0.0
    %217 = vmatprep.subr.mxu0 0.0
    %218 = vmatpush1.msra.mxu0 0.0
    %219 = vmatprep.subr.mxu0 0.0
    %220 = vmatpush1.msra.mxu0 0.0
    %221 = vmatprep.subr.mxu0 0.0
    %222 = vmatpush1.msra.mxu0 0.0
    %223 = vmatprep.subr.mxu0 %v146
    %224 = vmatpush1.msra.mxu0 %v145
    %225 = vmatprep.subr.mxu0 %v138
    %226 = vmatpush1.msra.mxu0 %v137
    %227 = vmatprep.subr.mxu0 %v130
    %228 = vmatpush1.msra.mxu0 %v129
    %229 = vmatprep.subr.mxu0 %v122
    %230 = vmatpush1.msra.mxu0 %v121
    %231 = vmatprep.subr.mxu0 0.0
    %232 = vmatpush2.msra.mxu0 0.0
    %233 = vmatprep.subr.mxu0 0.0
    %234 = vmatpush2.msra.mxu0 0.0
    %235 = vmatprep.subr.mxu0 0.0
    %236 = vmatpush2.msra.mxu0 0.0
    %237 = vmatprep.subr.mxu0 0.0
    %238 = vmatpush2.msra.mxu0 0.0
    %239 = vmatprep.subr.mxu0 0.0
    %240 = vmatpush2.msra.mxu0 0.0
    %241 = vmatprep.subr.mxu0 0.0
    %242 = vmatpush2.msra.mxu0 0.0
    %243 = vmatprep.subr.mxu0 0.0
    %244 = vmatpush2.msra.mxu0 0.0
    %245 = vmatprep.subr.mxu0 0.0
    %246 = vmatpush2.msra.mxu0 0.0
    %247 = vmatprep.subr.mxu0 0.0
    %248 = vmatpush2.msra.mxu0 0.0
    %249 = vmatprep.subr.mxu0 0.0
    %250 = vmatpush2.msra.mxu0 0.0
    %251 = vmatprep.subr.mxu0 0.0
    %252 = vmatpush2.msra.mxu0 0.0
    %253 = vmatprep.subr.mxu0 0.0
    %254 = vmatpush2.msra.mxu0 0.0
    %255 = vmatprep.subr.mxu0 0.0
    %256 = vmatpush2.msra.mxu0 0.0
    %257 = vmatprep.subr.mxu0 0.0
    %258 = vmatpush2.msra.mxu0 0.0
    %259 = vmatprep.subr.mxu0 0.0
    %260 = vmatpush2.msra.mxu0 0.0
    %261 = vmatprep.subr.mxu0 0.0
    %262 = vmatpush2.msra.mxu0 0.0
    %263 = vmatprep.mubr.f32.mxu0 0.0
    %264 = vmatmul.mubr.f32.gmra.mxu0 %v197
    %v265 = vpop.f32.mrf.mxu0
    %v266 = vadd.f32 %v158, %v265
    %v267 = vpop.f32.mrf.mxu0
    %v268 = vadd.f32 %v162, %v267
    %269 = vdwg.mxu0
    %270 = vmatprep.subr.mxu0 0.0
    %271 = vmatpush1.msra.mxu0 0.0
    %272 = vmatprep.subr.mxu0 0.0
    %273 = vmatpush1.msra.mxu0 0.0
    %274 = vmatprep.subr.mxu0 0.0
    %275 = vmatpush1.msra.mxu0 0.0
    %276 = vmatprep.subr.mxu0 0.0
    %277 = vmatpush1.msra.mxu0 0.0
    %278 = vmatprep.subr.mxu0 0.0
    %279 = vmatpush1.msra.mxu0 0.0
    %280 = vmatprep.subr.mxu0 0.0
    %281 = vmatpush1.msra.mxu0 0.0
    %282 = vmatprep.subr.mxu0 0.0
    %283 = vmatpush1.msra.mxu0 0.0
    %284 = vmatprep.subr.mxu0 0.0
    %285 = vmatpush1.msra.mxu0 0.0
    %286 = vmatprep.subr.mxu0 0.0
    %287 = vmatpush1.msra.mxu0 0.0
    %288 = vmatprep.subr.mxu0 0.0
    %289 = vmatpush1.msra.mxu0 0.0
    %290 = vmatprep.subr.mxu0 0.0
    %291 = vmatpush1.msra.mxu0 0.0
    %292 = vmatprep.subr.mxu0 0.0
    %293 = vmatpush1.msra.mxu0 0.0
    %294 = vmatprep.subr.mxu0 %v148
    %295 = vmatpush1.msra.mxu0 %v147
    %296 = vmatprep.subr.mxu0 %v140
    %297 = vmatpush1.msra.mxu0 %v139
    %298 = vmatprep.subr.mxu0 %v132
    %299 = vmatpush1.msra.mxu0 %v131
    %300 = vmatprep.subr.mxu0 %v124
    %301 = vmatpush1.msra.mxu0 %v123
    %302 = vmatprep.subr.mxu0 0.0
    %303 = vmatpush2.msra.mxu0 0.0
    %304 = vmatprep.subr.mxu0 0.0
    %305 = vmatpush2.msra.mxu0 0.0
    %306 = vmatprep.subr.mxu0 0.0
    %307 = vmatpush2.msra.mxu0 0.0
    %308 = vmatprep.subr.mxu0 0.0
    %309 = vmatpush2.msra.mxu0 0.0
    %310 = vmatprep.subr.mxu0 0.0
    %311 = vmatpush2.msra.mxu0 0.0
    %312 = vmatprep.subr.mxu0 0.0
    %313 = vmatpush2.msra.mxu0 0.0
    %314 = vmatprep.subr.mxu0 0.0
    %315 = vmatpush2.msra.mxu0 0.0
    %316 = vmatprep.subr.mxu0 0.0
    %317 = vmatpush2.msra.mxu0 0.0
    %318 = vmatprep.subr.mxu0 0.0
    %319 = vmatpush2.msra.mxu0 0.0
    %320 = vmatprep.subr.mxu0 0.0
    %321 = vmatpush2.msra.mxu0 0.0
    %322 = vmatprep.subr.mxu0 0.0
    %323 = vmatpush2.msra.mxu0 0.0
    %324 = vmatprep.subr.mxu0 0.0
    %325 = vmatpush2.msra.mxu0 0.0
    %326 = vmatprep.subr.mxu0 0.0
    %327 = vmatpush2.msra.mxu0 0.0
    %328 = vmatprep.subr.mxu0 0.0
    %329 = vmatpush2.msra.mxu0 0.0
    %330 = vmatprep.subr.mxu0 0.0
    %331 = vmatpush2.msra.mxu0 0.0
    %332 = vmatprep.subr.mxu0 0.0
    %333 = vmatpush2.msra.mxu0 0.0
    %334 = vmatprep.mubr.f32.mxu0 0.0
    %335 = vmatmul.mubr.f32.gmra.mxu0 %v197
    %v336 = vpop.f32.mrf.mxu0
    %v337 = vadd.f32 %v166, %v336
    %v338 = vpop.f32.mrf.mxu0
    %v339 = vadd.f32 %v170, %v338
    %340 = vdwg.mxu0
    %341 = vmatprep.subr.mxu0 0.0
    %342 = vmatpush1.msra.mxu0 0.0
    %343 = vmatprep.subr.mxu0 0.0
    %344 = vmatpush1.msra.mxu0 0.0
    %345 = vmatprep.subr.mxu0 0.0
    %346 = vmatpush1.msra.mxu0 0.0
    %347 = vmatprep.subr.mxu0 0.0
    %348 = vmatpush1.msra.mxu0 0.0
    %349 = vmatprep.subr.mxu0 0.0
    %350 = vmatpush1.msra.mxu0 0.0
    %351 = vmatprep.subr.mxu0 0.0
    %352 = vmatpush1.msra.mxu0 0.0
    %353 = vmatprep.subr.mxu0 0.0
    %354 = vmatpush1.msra.mxu0 0.0
    %355 = vmatprep.subr.mxu0 0.0
    %356 = vmatpush1.msra.mxu0 0.0
    %357 = vmatprep.subr.mxu0 0.0
    %358 = vmatpush1.msra.mxu0 0.0
    %359 = vmatprep.subr.mxu0 0.0
    %360 = vmatpush1.msra.mxu0 0.0
    %361 = vmatprep.subr.mxu0 0.0
    %362 = vmatpush1.msra.mxu0 0.0
    %363 = vmatprep.subr.mxu0 0.0
    %364 = vmatpush1.msra.mxu0 0.0
    %365 = vmatprep.subr.mxu0 %v150
    %366 = vmatpush1.msra.mxu0 %v149
    %367 = vmatprep.subr.mxu0 %v142
    %368 = vmatpush1.msra.mxu0 %v141
    %369 = vmatprep.subr.mxu0 %v134
    %370 = vmatpush1.msra.mxu0 %v133
    %371 = vmatprep.subr.mxu0 %v126
    %372 = vmatpush1.msra.mxu0 %v125
    %373 = vmatprep.subr.mxu0 0.0
    %374 = vmatpush2.msra.mxu0 0.0
    %375 = vmatprep.subr.mxu0 0.0
    %376 = vmatpush2.msra.mxu0 0.0
    %377 = vmatprep.subr.mxu0 0.0
    %378 = vmatpush2.msra.mxu0 0.0
    %379 = vmatprep.subr.mxu0 0.0
    %380 = vmatpush2.msra.mxu0 0.0
    %381 = vmatprep.subr.mxu0 0.0
    %382 = vmatpush2.msra.mxu0 0.0
    %383 = vmatprep.subr.mxu0 0.0
    %384 = vmatpush2.msra.mxu0 0.0
    %385 = vmatprep.subr.mxu0 0.0
    %386 = vmatpush2.msra.mxu0 0.0
    %387 = vmatprep.subr.mxu0 0.0
    %388 = vmatpush2.msra.mxu0 0.0
    %389 = vmatprep.subr.mxu0 0.0
    %390 = vmatpush2.msra.mxu0 0.0
    %391 = vmatprep.subr.mxu0 0.0
    %392 = vmatpush2.msra.mxu0 0.0
    %393 = vmatprep.subr.mxu0 0.0
    %394 = vmatpush2.msra.mxu0 0.0
    %395 = vmatprep.subr.mxu0 0.0
    %396 = vmatpush2.msra.mxu0 0.0
    %397 = vmatprep.subr.mxu0 0.0
    %398 = vmatpush2.msra.mxu0 0.0
    %399 = vmatprep.subr.mxu0 0.0
    %400 = vmatpush2.msra.mxu0 0.0
    %401 = vmatprep.subr.mxu0 0.0
    %402 = vmatpush2.msra.mxu0 0.0
    %403 = vmatprep.subr.mxu0 0.0
    %404 = vmatpush2.msra.mxu0 0.0
    %405 = vmatprep.mubr.f32.mxu0 0.0
    %406 = vmatmul.mubr.f32.gmra.mxu0 %v197
    %v407 = vpop.f32.mrf.mxu0
    %v408 = vadd.f32 %v174, %v407
    %v409 = vpop.f32.mrf.mxu0
    %v410 = vadd.f32 %v178, %v409
    %411 = vdwg.mxu0
    %412 = vmatprep.subr.mxu0 0.0
    %413 = vmatpush1.msra.mxu0 0.0
    %414 = vmatprep.subr.mxu0 0.0
    %415 = vmatpush1.msra.mxu0 0.0
    %416 = vmatprep.subr.mxu0 0.0
    %417 = vmatpush1.msra.mxu0 0.0
    %418 = vmatprep.subr.mxu0 0.0
    %419 = vmatpush1.msra.mxu0 0.0
    %420 = vmatprep.subr.mxu0 0.0
    %421 = vmatpush1.msra.mxu0 0.0
    %422 = vmatprep.subr.mxu0 0.0
    %423 = vmatpush1.msra.mxu0 0.0
    %424 = vmatprep.subr.mxu0 0.0
    %425 = vmatpush1.msra.mxu0 0.0
    %426 = vmatprep.subr.mxu0 0.0
    %427 = vmatpush1.msra.mxu0 0.0
    %428 = vmatprep.subr.mxu0 0.0
    %429 = vmatpush1.msra.mxu0 0.0
    %430 = vmatprep.subr.mxu0 0.0
    %431 = vmatpush1.msra.mxu0 0.0
    %432 = vmatprep.subr.mxu0 0.0
    %433 = vmatpush1.msra.mxu0 0.0
    %434 = vmatprep.subr.mxu0 0.0
    %435 = vmatpush1.msra.mxu0 0.0
    %436 = vmatprep.subr.mxu0 %v152
    %437 = vmatpush1.msra.mxu0 %v151
    %438 = vmatprep.subr.mxu0 %v144
    %439 = vmatpush1.msra.mxu0 %v143
    %440 = vmatprep.subr.mxu0 %v136
    %441 = vmatpush1.msra.mxu0 %v135
    %442 = vmatprep.subr.mxu0 %v128
    %443 = vmatpush1.msra.mxu0 %v127
    %444 = vmatprep.subr.mxu0 0.0
    %445 = vmatpush2.msra.mxu0 0.0
    %446 = vmatprep.subr.mxu0 0.0
    %447 = vmatpush2.msra.mxu0 0.0
    %448 = vmatprep.subr.mxu0 0.0
    %449 = vmatpush2.msra.mxu0 0.0
    %450 = vmatprep.subr.mxu0 0.0
    %451 = vmatpush2.msra.mxu0 0.0
    %452 = vmatprep.subr.mxu0 0.0
    %453 = vmatpush2.msra.mxu0 0.0
    %454 = vmatprep.subr.mxu0 0.0
    %455 = vmatpush2.msra.mxu0 0.0
    %456 = vmatprep.subr.mxu0 0.0
    %457 = vmatpush2.msra.mxu0 0.0
    %458 = vmatprep.subr.mxu0 0.0
    %459 = vmatpush2.msra.mxu0 0.0
    %460 = vmatprep.subr.mxu0 0.0
    %461 = vmatpush2.msra.mxu0 0.0
    %462 = vmatprep.subr.mxu0 0.0
    %463 = vmatpush2.msra.mxu0 0.0
    %464 = vmatprep.subr.mxu0 0.0
    %465 = vmatpush2.msra.mxu0 0.0
    %466 = vmatprep.subr.mxu0 0.0
    %467 = vmatpush2.msra.mxu0 0.0
    %468 = vmatprep.subr.mxu0 0.0
    %469 = vmatpush2.msra.mxu0 0.0
    %470 = vmatprep.subr.mxu0 0.0
    %471 = vmatpush2.msra.mxu0 0.0
    %472 = vmatprep.subr.mxu0 0.0
    %473 = vmatpush2.msra.mxu0 0.0
    %474 = vmatprep.subr.mxu0 0.0
    %475 = vmatpush2.msra.mxu0 0.0
    %476 = vmatprep.mubr.f32.mxu0 0.0
    %477 = vmatmul.mubr.f32.gmra.mxu0 %v197
    %v478 = vpop.f32.mrf.mxu0
    %v479 = vadd.f32 %v182, %v478
    %v480 = vpop.f32.mrf.mxu0
    %v481 = vadd.f32 %v186, %v480
    %482 = vdwg.mxu0
    %v483 = vmax.f32 %v266, 0.0
    %v484 = vmax.f32 %v268, 0.0
    %v485 = vmax.f32 %v337, 0.0
    %v486 = vmax.f32 %v339, 0.0
    %v487 = vmax.f32 %v408, 0.0
    %v488 = vmax.f32 %v410, 0.0
    %v489 = vmax.f32 %v479, 0.0
    %v490 = vmax.f32 %v481, 0.0
    %v491 = vld [vmem:[#allocation8] sm:$0xff]
    %v492 = vld [vmem:[#allocation8 + $0x8] sm:$0xff]
    %v493 = vld [vmem:[#allocation8 + $0x10] sm:$0xff]
    %v494 = vld [vmem:[#allocation8 + $0x18] sm:$0xff]
    %v495 = vld [vmem:[#allocation8 + $0x20] sm:$0xff]
    %v496 = vld [vmem:[#allocation8 + $0x28] sm:$0xff]
    %v497 = vld [vmem:[#allocation8 + $0x30] sm:$0xff]
    %v498 = vld [vmem:[#allocation8 + $0x38] sm:$0xff]
    %v499 = vld [vmem:[#allocation8 + $0x40] sm:$0xff]
    %v500 = vld [vmem:[#allocation8 + $0x48] sm:$0xff]
    %v501 = vld [vmem:[#allocation8 + $0x50] sm:$0xff]
    %v502 = vld [vmem:[#allocation8 + $0x58] sm:$0xff]
    %v503 = vld [vmem:[#allocation8 + $0x60] sm:$0xff]
    %v504 = vld [vmem:[#allocation8 + $0x68] sm:$0xff]
    %v505 = vld [vmem:[#allocation8 + $0x70] sm:$0xff]
    %v506 = vld [vmem:[#allocation8 + $0x78] sm:$0xff]
    %v507 = vld [vmem:[#allocation8 + $0x80] sm:$0xff]
    %v508 = vld [vmem:[#allocation8 + $0x88] sm:$0xff]
    %v509 = vld [vmem:[#allocation8 + $0x90] sm:$0xff]
    %v510 = vld [vmem:[#allocation8 + $0x98] sm:$0xff]
    %v511 = vld [vmem:[#allocation8 + $0xa0] sm:$0xff]
    %v512 = vld [vmem:[#allocation8 + $0xa8] sm:$0xff]
    %v513 = vld [vmem:[#allocation8 + $0xb0] sm:$0xff]
    %v514 = vld [vmem:[#allocation8 + $0xb8] sm:$0xff]
    %v515 = vld [vmem:[#allocation8 + $0xc0] sm:$0xff]
    %v516 = vld [vmem:[#allocation8 + $0xc8] sm:$0xff]
    %v517 = vld [vmem:[#allocation8 + $0xd0] sm:$0xff]
    %v518 = vld [vmem:[#allocation8 + $0xd8] sm:$0xff]
    %v519 = vld [vmem:[#allocation8 + $0xe0] sm:$0xff]
    %v520 = vld [vmem:[#allocation8 + $0xe8] sm:$0xff]
    %v521 = vld [vmem:[#allocation8 + $0xf0] sm:$0xff]
    %v522 = vld [vmem:[#allocation8 + $0xf8] sm:$0xff]
    %v523 = vld [vmem:[#allocation8 + $0x100] sm:$0xff]
    %v524 = vld [vmem:[#allocation8 + $0x108] sm:$0xff]
    %v525 = vld [vmem:[#allocation8 + $0x110] sm:$0xff]
    %v526 = vld [vmem:[#allocation8 + $0x118] sm:$0xff]
    %v527 = vld [vmem:[#allocation8 + $0x120] sm:$0xff]
    %v528 = vld [vmem:[#allocation8 + $0x128] sm:$0xff]
    %v529 = vld [vmem:[#allocation8 + $0x130] sm:$0xff]
    %v530 = vld [vmem:[#allocation8 + $0x138] sm:$0xff]
    %v531 = vld [vmem:[#allocation8 + $0x140] sm:$0xff]
    %v532 = vld [vmem:[#allocation8 + $0x148] sm:$0xff]
    %v533 = vld [vmem:[#allocation8 + $0x150] sm:$0xff]
    %v534 = vld [vmem:[#allocation8 + $0x158] sm:$0xff]
    %v535 = vld [vmem:[#allocation8 + $0x160] sm:$0xff]
    %v536 = vld [vmem:[#allocation8 + $0x168] sm:$0xff]
    %v537 = vld [vmem:[#allocation8 + $0x170] sm:$0xff]
    %v538 = vld [vmem:[#allocation8 + $0x178] sm:$0xff]
    %v539 = vld [vmem:[#allocation8 + $0x180] sm:$0xff]
    %v540 = vld [vmem:[#allocation8 + $0x188] sm:$0xff]
    %v541 = vld [vmem:[#allocation8 + $0x190] sm:$0xff]
    %v542 = vld [vmem:[#allocation8 + $0x198] sm:$0xff]
    %v543 = vld [vmem:[#allocation8 + $0x1a0] sm:$0xff]
    %v544 = vld [vmem:[#allocation8 + $0x1a8] sm:$0xff]
    %v545 = vld [vmem:[#allocation8 + $0x1b0] sm:$0xff]
    %v546 = vld [vmem:[#allocation8 + $0x1b8] sm:$0xff]
    %v547 = vld [vmem:[#allocation8 + $0x1c0] sm:$0xff]
    %v548 = vld [vmem:[#allocation8 + $0x1c8] sm:$0xff]
    %v549 = vld [vmem:[#allocation8 + $0x1d0] sm:$0xff]
    %v550 = vld [vmem:[#allocation8 + $0x1d8] sm:$0xff]
    %v551 = vld [vmem:[#allocation8 + $0x1e0] sm:$0xff]
    %v552 = vld [vmem:[#allocation8 + $0x1e8] sm:$0xff]
    %v553 = vld [vmem:[#allocation8 + $0x1f0] sm:$0xff]
    %v554 = vld [vmem:[#allocation8 + $0x1f8] sm:$0xff]
    %v555 = vld [vmem:[#allocation8 + $0x200] sm:$0xff]
    %v556 = vld [vmem:[#allocation8 + $0x208] sm:$0xff]
    %v557 = vld [vmem:[#allocation8 + $0x210] sm:$0xff]
    %v558 = vld [vmem:[#allocation8 + $0x218] sm:$0xff]
    %v559 = vld [vmem:[#allocation8 + $0x220] sm:$0xff]
    %v560 = vld [vmem:[#allocation8 + $0x228] sm:$0xff]
    %v561 = vld [vmem:[#allocation8 + $0x230] sm:$0xff]
    %v562 = vld [vmem:[#allocation8 + $0x238] sm:$0xff]
    %v563 = vld [vmem:[#allocation8 + $0x240] sm:$0xff]
    %v564 = vld [vmem:[#allocation8 + $0x248] sm:$0xff]
    %v565 = vld [vmem:[#allocation8 + $0x250] sm:$0xff]
    %v566 = vld [vmem:[#allocation8 + $0x258] sm:$0xff]
    %v567 = vld [vmem:[#allocation8 + $0x260] sm:$0xff]
    %v568 = vld [vmem:[#allocation8 + $0x268] sm:$0xff]
    %v569 = vld [vmem:[#allocation8 + $0x270] sm:$0xff]
    %v570 = vld [vmem:[#allocation8 + $0x278] sm:$0xff]
    %v571 = vld [vmem:[#allocation8 + $0x280] sm:$0xff]
    %v572 = vld [vmem:[#allocation8 + $0x288] sm:$0xff]
    %v573 = vld [vmem:[#allocation8 + $0x290] sm:$0xff]
    %v574 = vld [vmem:[#allocation8 + $0x298] sm:$0xff]
    %v575 = vld [vmem:[#allocation8 + $0x2a0] sm:$0xff]
    %v576 = vld [vmem:[#allocation8 + $0x2a8] sm:$0xff]
    %v577 = vld [vmem:[#allocation8 + $0x2b0] sm:$0xff]
    %v578 = vld [vmem:[#allocation8 + $0x2b8] sm:$0xff]
    %v579 = vld [vmem:[#allocation8 + $0x2c0] sm:$0xff]
    %v580 = vld [vmem:[#allocation8 + $0x2c8] sm:$0xff]
    %v581 = vld [vmem:[#allocation8 + $0x2d0] sm:$0xff]
    %v582 = vld [vmem:[#allocation8 + $0x2d8] sm:$0xff]
    %v583 = vld [vmem:[#allocation8 + $0x2e0] sm:$0xff]
    %v584 = vld [vmem:[#allocation8 + $0x2e8] sm:$0xff]
    %v585 = vld [vmem:[#allocation8 + $0x2f0] sm:$0xff]
    %v586 = vld [vmem:[#allocation8 + $0x2f8] sm:$0xff]
    %v587 = vld [vmem:[#allocation8 + $0x300] sm:$0xff]
    %v588 = vld [vmem:[#allocation8 + $0x308] sm:$0xff]
    %v589 = vld [vmem:[#allocation8 + $0x310] sm:$0xff]
    %v590 = vld [vmem:[#allocation8 + $0x318] sm:$0xff]
    %v591 = vld [vmem:[#allocation8 + $0x320] sm:$0xff]
    %v592 = vld [vmem:[#allocation8 + $0x328] sm:$0xff]
    %v593 = vld [vmem:[#allocation8 + $0x330] sm:$0xff]
    %v594 = vld [vmem:[#allocation8 + $0x338] sm:$0xff]
    %v595 = vld [vmem:[#allocation8 + $0x340] sm:$0xff]
    %v596 = vld [vmem:[#allocation8 + $0x348] sm:$0xff]
    %v597 = vld [vmem:[#allocation8 + $0x350] sm:$0xff]
    %v598 = vld [vmem:[#allocation8 + $0x358] sm:$0xff]
    %v599 = vld [vmem:[#allocation8 + $0x360] sm:$0xff]
    %v600 = vld [vmem:[#allocation8 + $0x368] sm:$0xff]
    %v601 = vld [vmem:[#allocation8 + $0x370] sm:$0xff]
    %v602 = vld [vmem:[#allocation8 + $0x378] sm:$0xff]
    %v603 = vld [vmem:[#allocation8 + $0x380] sm:$0xff]
    %v604 = vld [vmem:[#allocation8 + $0x388] sm:$0xff]
    %v605 = vld [vmem:[#allocation8 + $0x390] sm:$0xff]
    %v606 = vld [vmem:[#allocation8 + $0x398] sm:$0xff]
    %v607 = vld [vmem:[#allocation8 + $0x3a0] sm:$0xff]
    %v608 = vld [vmem:[#allocation8 + $0x3a8] sm:$0xff]
    %v609 = vld [vmem:[#allocation8 + $0x3b0] sm:$0xff]
    %v610 = vld [vmem:[#allocation8 + $0x3b8] sm:$0xff]
    %v611 = vld [vmem:[#allocation8 + $0x3c0] sm:$0xff]
    %v612 = vld [vmem:[#allocation8 + $0x3c8] sm:$0xff]
    %v613 = vld [vmem:[#allocation8 + $0x3d0] sm:$0xff]
    %v614 = vld [vmem:[#allocation8 + $0x3d8] sm:$0xff]
    %v615 = vld [vmem:[#allocation8 + $0x3e0] sm:$0xff]
    %v616 = vld [vmem:[#allocation8 + $0x3e8] sm:$0xff]
    %v617 = vld [vmem:[#allocation8 + $0x3f0] sm:$0xff]
    %v618 = vld [vmem:[#allocation8 + $0x3f8] sm:$0xff]
    %v619 = vld [vmem:[#allocation8 + $0x400] sm:$0xff]
    %v620 = vld [vmem:[#allocation8 + $0x408] sm:$0xff]
    %v621 = vld [vmem:[#allocation8 + $0x410] sm:$0xff]
    %v622 = vld [vmem:[#allocation8 + $0x418] sm:$0xff]
    %v623 = vld [vmem:[#allocation8 + $0x420] sm:$0xff]
    %v624 = vld [vmem:[#allocation8 + $0x428] sm:$0xff]
    %v625 = vld [vmem:[#allocation8 + $0x430] sm:$0xff]
    %v626 = vld [vmem:[#allocation8 + $0x438] sm:$0xff]
    %v627 = vld [vmem:[#allocation8 + $0x440] sm:$0xff]
    %v628 = vld [vmem:[#allocation8 + $0x448] sm:$0xff]
    %v629 = vld [vmem:[#allocation8 + $0x450] sm:$0xff]
    %v630 = vld [vmem:[#allocation8 + $0x458] sm:$0xff]
    %v631 = vld [vmem:[#allocation8 + $0x460] sm:$0xff]
    %v632 = vld [vmem:[#allocation8 + $0x468] sm:$0xff]
    %v633 = vld [vmem:[#allocation8 + $0x470] sm:$0xff]
    %v634 = vld [vmem:[#allocation8 + $0x478] sm:$0xff]
    %v635 = vld [vmem:[#allocation8 + $0x480] sm:$0xff]
    %v636 = vld [vmem:[#allocation8 + $0x488] sm:$0xff]
    %v637 = vld [vmem:[#allocation8 + $0x490] sm:$0xff]
    %v638 = vld [vmem:[#allocation8 + $0x498] sm:$0xff]
    %v639 = vld [vmem:[#allocation8 + $0x4a0] sm:$0xff]
    %v640 = vld [vmem:[#allocation8 + $0x4a8] sm:$0xff]
    %v641 = vld [vmem:[#allocation8 + $0x4b0] sm:$0xff]
    %v642 = vld [vmem:[#allocation8 + $0x4b8] sm:$0xff]
    %v643 = vld [vmem:[#allocation8 + $0x4c0] sm:$0xff]
    %v644 = vld [vmem:[#allocation8 + $0x4c8] sm:$0xff]
    %v645 = vld [vmem:[#allocation8 + $0x4d0] sm:$0xff]
    %v646 = vld [vmem:[#allocation8 + $0x4d8] sm:$0xff]
    %v647 = vld [vmem:[#allocation8 + $0x4e0] sm:$0xff]
    %v648 = vld [vmem:[#allocation8 + $0x4e8] sm:$0xff]
    %v649 = vld [vmem:[#allocation8 + $0x4f0] sm:$0xff]
    %v650 = vld [vmem:[#allocation8 + $0x4f8] sm:$0xff]
    %v651 = vld [vmem:[#allocation8 + $0x500] sm:$0xff]
    %v652 = vld [vmem:[#allocation8 + $0x508] sm:$0xff]
    %v653 = vld [vmem:[#allocation8 + $0x510] sm:$0xff]
    %v654 = vld [vmem:[#allocation8 + $0x518] sm:$0xff]
    %v655 = vld [vmem:[#allocation8 + $0x520] sm:$0xff]
    %v656 = vld [vmem:[#allocation8 + $0x528] sm:$0xff]
    %v657 = vld [vmem:[#allocation8 + $0x530] sm:$0xff]
    %v658 = vld [vmem:[#allocation8 + $0x538] sm:$0xff]
    %v659 = vld [vmem:[#allocation8 + $0x540] sm:$0xff]
    %v660 = vld [vmem:[#allocation8 + $0x548] sm:$0xff]
    %v661 = vld [vmem:[#allocation8 + $0x550] sm:$0xff]
    %v662 = vld [vmem:[#allocation8 + $0x558] sm:$0xff]
    %v663 = vld [vmem:[#allocation8 + $0x560] sm:$0xff]
    %v664 = vld [vmem:[#allocation8 + $0x568] sm:$0xff]
    %v665 = vld [vmem:[#allocation8 + $0x570] sm:$0xff]
    %v666 = vld [vmem:[#allocation8 + $0x578] sm:$0xff]
    %v667 = vld [vmem:[#allocation8 + $0x580] sm:$0xff]
    %v668 = vld [vmem:[#allocation8 + $0x588] sm:$0xff]
    %v669 = vld [vmem:[#allocation8 + $0x590] sm:$0xff]
    %v670 = vld [vmem:[#allocation8 + $0x598] sm:$0xff]
    %v671 = vld [vmem:[#allocation8 + $0x5a0] sm:$0xff]
    %v672 = vld [vmem:[#allocation8 + $0x5a8] sm:$0xff]
    %v673 = vld [vmem:[#allocation8 + $0x5b0] sm:$0xff]
    %v674 = vld [vmem:[#allocation8 + $0x5b8] sm:$0xff]
    %v675 = vld [vmem:[#allocation8 + $0x5c0] sm:$0xff]
    %v676 = vld [vmem:[#allocation8 + $0x5c8] sm:$0xff]
    %v677 = vld [vmem:[#allocation8 + $0x5d0] sm:$0xff]
    %v678 = vld [vmem:[#allocation8 + $0x5d8] sm:$0xff]
    %v679 = vld [vmem:[#allocation8 + $0x5e0] sm:$0xff]
    %v680 = vld [vmem:[#allocation8 + $0x5e8] sm:$0xff]
    %v681 = vld [vmem:[#allocation8 + $0x5f0] sm:$0xff]
    %v682 = vld [vmem:[#allocation8 + $0x5f8] sm:$0xff]
    %v683 = vld [vmem:[#allocation8 + $0x600] sm:$0xff]
    %v684 = vld [vmem:[#allocation8 + $0x608] sm:$0xff]
    %v685 = vld [vmem:[#allocation8 + $0x610] sm:$0xff]
    %v686 = vld [vmem:[#allocation8 + $0x618] sm:$0xff]
    %v687 = vld [vmem:[#allocation8 + $0x620] sm:$0xff]
    %v688 = vld [vmem:[#allocation8 + $0x628] sm:$0xff]
    %v689 = vld [vmem:[#allocation8 + $0x630] sm:$0xff]
    %v690 = vld [vmem:[#allocation8 + $0x638] sm:$0xff]
    %v691 = vld [vmem:[#allocation8 + $0x640] sm:$0xff]
    %v692 = vld [vmem:[#allocation8 + $0x648] sm:$0xff]
    %v693 = vld [vmem:[#allocation8 + $0x650] sm:$0xff]
    %v694 = vld [vmem:[#allocation8 + $0x658] sm:$0xff]
    %v695 = vld [vmem:[#allocation8 + $0x660] sm:$0xff]
    %v696 = vld [vmem:[#allocation8 + $0x668] sm:$0xff]
    %v697 = vld [vmem:[#allocation8 + $0x670] sm:$0xff]
    %v698 = vld [vmem:[#allocation8 + $0x678] sm:$0xff]
    %v699 = vld [vmem:[#allocation8 + $0x680] sm:$0xff]
    %v700 = vld [vmem:[#allocation8 + $0x688] sm:$0xff]
    %v701 = vld [vmem:[#allocation8 + $0x690] sm:$0xff]
    %v702 = vld [vmem:[#allocation8 + $0x698] sm:$0xff]
    %v703 = vld [vmem:[#allocation8 + $0x6a0] sm:$0xff]
    %v704 = vld [vmem:[#allocation8 + $0x6a8] sm:$0xff]
    %v705 = vld [vmem:[#allocation8 + $0x6b0] sm:$0xff]
    %v706 = vld [vmem:[#allocation8 + $0x6b8] sm:$0xff]
    %v707 = vld [vmem:[#allocation8 + $0x6c0] sm:$0xff]
    %v708 = vld [vmem:[#allocation8 + $0x6c8] sm:$0xff]
    %v709 = vld [vmem:[#allocation8 + $0x6d0] sm:$0xff]
    %v710 = vld [vmem:[#allocation8 + $0x6d8] sm:$0xff]
    %v711 = vld [vmem:[#allocation8 + $0x6e0] sm:$0xff]
    %v712 = vld [vmem:[#allocation8 + $0x6e8] sm:$0xff]
    %v713 = vld [vmem:[#allocation8 + $0x6f0] sm:$0xff]
    %v714 = vld [vmem:[#allocation8 + $0x6f8] sm:$0xff]
    %v715 = vld [vmem:[#allocation8 + $0x700] sm:$0xff]
    %v716 = vld [vmem:[#allocation8 + $0x708] sm:$0xff]
    %v717 = vld [vmem:[#allocation8 + $0x710] sm:$0xff]
    %v718 = vld [vmem:[#allocation8 + $0x718] sm:$0xff]
    %v719 = vld [vmem:[#allocation8 + $0x720] sm:$0xff]
    %v720 = vld [vmem:[#allocation8 + $0x728] sm:$0xff]
    %v721 = vld [vmem:[#allocation8 + $0x730] sm:$0xff]
    %v722 = vld [vmem:[#allocation8 + $0x738] sm:$0xff]
    %v723 = vld [vmem:[#allocation8 + $0x740] sm:$0xff]
    %v724 = vld [vmem:[#allocation8 + $0x748] sm:$0xff]
    %v725 = vld [vmem:[#allocation8 + $0x750] sm:$0xff]
    %v726 = vld [vmem:[#allocation8 + $0x758] sm:$0xff]
    %v727 = vld [vmem:[#allocation8 + $0x760] sm:$0xff]
    %v728 = vld [vmem:[#allocation8 + $0x768] sm:$0xff]
    %v729 = vld [vmem:[#allocation8 + $0x770] sm:$0xff]
    %v730 = vld [vmem:[#allocation8 + $0x778] sm:$0xff]
    %v731 = vld [vmem:[#allocation8 + $0x780] sm:$0xff]
    %v732 = vld [vmem:[#allocation8 + $0x788] sm:$0xff]
    %v733 = vld [vmem:[#allocation8 + $0x790] sm:$0xff]
    %v734 = vld [vmem:[#allocation8 + $0x798] sm:$0xff]
    %v735 = vld [vmem:[#allocation8 + $0x7a0] sm:$0xff]
    %v736 = vld [vmem:[#allocation8 + $0x7a8] sm:$0xff]
    %v737 = vld [vmem:[#allocation8 + $0x7b0] sm:$0xff]
    %v738 = vld [vmem:[#allocation8 + $0x7b8] sm:$0xff]
    %v739 = vld [vmem:[#allocation8 + $0x7c0] sm:$0xff]
    %v740 = vld [vmem:[#allocation8 + $0x7c8] sm:$0xff]
    %v741 = vld [vmem:[#allocation8 + $0x7d0] sm:$0xff]
    %v742 = vld [vmem:[#allocation8 + $0x7d8] sm:$0xff]
    %v743 = vld [vmem:[#allocation8 + $0x7e0] sm:$0xff]
    %v744 = vld [vmem:[#allocation8 + $0x7e8] sm:$0xff]
    %v745 = vld [vmem:[#allocation8 + $0x7f0] sm:$0xff]
    %v746 = vld [vmem:[#allocation8 + $0x7f8] sm:$0xff]
    %v747 = vld [vmem:[#allocation8 + $0x800] sm:$0xff]
    %v748 = vld [vmem:[#allocation8 + $0x808] sm:$0xff]
    %v749 = vld [vmem:[#allocation8 + $0x810] sm:$0xff]
    %v750 = vld [vmem:[#allocation8 + $0x818] sm:$0xff]
    %v751 = vld [vmem:[#allocation8 + $0x820] sm:$0xff]
    %v752 = vld [vmem:[#allocation8 + $0x828] sm:$0xff]
    %v753 = vld [vmem:[#allocation8 + $0x830] sm:$0xff]
    %v754 = vld [vmem:[#allocation8 + $0x838] sm:$0xff]
    %v755 = vld [vmem:[#allocation8 + $0x840] sm:$0xff]
    %v756 = vld [vmem:[#allocation8 + $0x848] sm:$0xff]
    %v757 = vld [vmem:[#allocation8 + $0x850] sm:$0xff]
    %v758 = vld [vmem:[#allocation8 + $0x858] sm:$0xff]
    %v759 = vld [vmem:[#allocation8 + $0x860] sm:$0xff]
    %v760 = vld [vmem:[#allocation8 + $0x868] sm:$0xff]
    %v761 = vld [vmem:[#allocation8 + $0x870] sm:$0xff]
    %v762 = vld [vmem:[#allocation8 + $0x878] sm:$0xff]
    %v763 = vld [vmem:[#allocation8 + $0x880] sm:$0xff]
    %v764 = vld [vmem:[#allocation8 + $0x888] sm:$0xff]
    %v765 = vld [vmem:[#allocation8 + $0x890] sm:$0xff]
    %v766 = vld [vmem:[#allocation8 + $0x898] sm:$0xff]
    %v767 = vld [vmem:[#allocation8 + $0x8a0] sm:$0xff]
    %v768 = vld [vmem:[#allocation8 + $0x8a8] sm:$0xff]
    %v769 = vld [vmem:[#allocation8 + $0x8b0] sm:$0xff]
    %v770 = vld [vmem:[#allocation8 + $0x8b8] sm:$0xff]
    %v771 = vld [vmem:[#allocation8 + $0x8c0] sm:$0xff]
    %v772 = vld [vmem:[#allocation8 + $0x8c8] sm:$0xff]
    %v773 = vld [vmem:[#allocation8 + $0x8d0] sm:$0xff]
    %v774 = vld [vmem:[#allocation8 + $0x8d8] sm:$0xff]
    %v775 = vld [vmem:[#allocation8 + $0x8e0] sm:$0xff]
    %v776 = vld [vmem:[#allocation8 + $0x8e8] sm:$0xff]
    %v777 = vld [vmem:[#allocation8 + $0x8f0] sm:$0xff]
    %v778 = vld [vmem:[#allocation8 + $0x8f8] sm:$0xff]
    %v779 = vld [vmem:[#allocation8 + $0x900] sm:$0xff]
    %v780 = vld [vmem:[#allocation8 + $0x908] sm:$0xff]
    %v781 = vld [vmem:[#allocation8 + $0x910] sm:$0xff]
    %v782 = vld [vmem:[#allocation8 + $0x918] sm:$0xff]
    %v783 = vld [vmem:[#allocation8 + $0x920] sm:$0xff]
    %v784 = vld [vmem:[#allocation8 + $0x928] sm:$0xff]
    %v785 = vld [vmem:[#allocation8 + $0x930] sm:$0xff]
    %v786 = vld [vmem:[#allocation8 + $0x938] sm:$0xff]
    %v787 = vld [vmem:[#allocation8 + $0x940] sm:$0xff]
    %v788 = vld [vmem:[#allocation8 + $0x948] sm:$0xff]
    %v789 = vld [vmem:[#allocation8 + $0x950] sm:$0xff]
    %v790 = vld [vmem:[#allocation8 + $0x958] sm:$0xff]
    %v791 = vld [vmem:[#allocation8 + $0x960] sm:$0xff]
    %v792 = vld [vmem:[#allocation8 + $0x968] sm:$0xff]
    %v793 = vld [vmem:[#allocation8 + $0x970] sm:$0xff]
    %v794 = vld [vmem:[#allocation8 + $0x978] sm:$0xff]
    %v795 = vld [vmem:[#allocation8 + $0x980] sm:$0xff]
    %v796 = vld [vmem:[#allocation8 + $0x988] sm:$0xff]
    %v797 = vld [vmem:[#allocation8 + $0x990] sm:$0xff]
    %v798 = vld [vmem:[#allocation8 + $0x998] sm:$0xff]
    %v799 = vld [vmem:[#allocation8 + $0x9a0] sm:$0xff]
    %v800 = vld [vmem:[#allocation8 + $0x9a8] sm:$0xff]
    %v801 = vld [vmem:[#allocation8 + $0x9b0] sm:$0xff]
    %v802 = vld [vmem:[#allocation8 + $0x9b8] sm:$0xff]
    %v803 = vld [vmem:[#allocation8 + $0x9c0] sm:$0xff]
    %v804 = vld [vmem:[#allocation8 + $0x9c8] sm:$0xff]
    %v805 = vld [vmem:[#allocation8 + $0x9d0] sm:$0xff]
    %v806 = vld [vmem:[#allocation8 + $0x9d8] sm:$0xff]
    %v807 = vld [vmem:[#allocation8 + $0x9e0] sm:$0xff]
    %v808 = vld [vmem:[#allocation8 + $0x9e8] sm:$0xff]
    %v809 = vld [vmem:[#allocation8 + $0x9f0] sm:$0xff]
    %v810 = vld [vmem:[#allocation8 + $0x9f8] sm:$0xff]
    %v811 = vld [vmem:[#allocation8 + $0xa00] sm:$0xff]
    %v812 = vld [vmem:[#allocation8 + $0xa08] sm:$0xff]
    %v813 = vld [vmem:[#allocation8 + $0xa10] sm:$0xff]
    %v814 = vld [vmem:[#allocation8 + $0xa18] sm:$0xff]
    %v815 = vld [vmem:[#allocation8 + $0xa20] sm:$0xff]
    %v816 = vld [vmem:[#allocation8 + $0xa28] sm:$0xff]
    %v817 = vld [vmem:[#allocation8 + $0xa30] sm:$0xff]
    %v818 = vld [vmem:[#allocation8 + $0xa38] sm:$0xff]
    %v819 = vld [vmem:[#allocation8 + $0xa40] sm:$0xff]
    %v820 = vld [vmem:[#allocation8 + $0xa48] sm:$0xff]
    %v821 = vld [vmem:[#allocation8 + $0xa50] sm:$0xff]
    %v822 = vld [vmem:[#allocation8 + $0xa58] sm:$0xff]
    %v823 = vld [vmem:[#allocation8 + $0xa60] sm:$0xff]
    %v824 = vld [vmem:[#allocation8 + $0xa68] sm:$0xff]
    %v825 = vld [vmem:[#allocation8 + $0xa70] sm:$0xff]
    %v826 = vld [vmem:[#allocation8 + $0xa78] sm:$0xff]
    %v827 = vld [vmem:[#allocation8 + $0xa80] sm:$0xff]
    %v828 = vld [vmem:[#allocation8 + $0xa88] sm:$0xff]
    %v829 = vld [vmem:[#allocation8 + $0xa90] sm:$0xff]
    %v830 = vld [vmem:[#allocation8 + $0xa98] sm:$0xff]
    %v831 = vld [vmem:[#allocation8 + $0xaa0] sm:$0xff]
    %v832 = vld [vmem:[#allocation8 + $0xaa8] sm:$0xff]
    %v833 = vld [vmem:[#allocation8 + $0xab0] sm:$0xff]
    %v834 = vld [vmem:[#allocation8 + $0xab8] sm:$0xff]
    %v835 = vld [vmem:[#allocation8 + $0xac0] sm:$0xff]
    %v836 = vld [vmem:[#allocation8 + $0xac8] sm:$0xff]
    %v837 = vld [vmem:[#allocation8 + $0xad0] sm:$0xff]
    %v838 = vld [vmem:[#allocation8 + $0xad8] sm:$0xff]
    %v839 = vld [vmem:[#allocation8 + $0xae0] sm:$0xff]
    %v840 = vld [vmem:[#allocation8 + $0xae8] sm:$0xff]
    %v841 = vld [vmem:[#allocation8 + $0xaf0] sm:$0xff]
    %v842 = vld [vmem:[#allocation8 + $0xaf8] sm:$0xff]
    %v843 = vld [vmem:[#allocation8 + $0xb00] sm:$0xff]
    %v844 = vld [vmem:[#allocation8 + $0xb08] sm:$0xff]
    %v845 = vld [vmem:[#allocation8 + $0xb10] sm:$0xff]
    %v846 = vld [vmem:[#allocation8 + $0xb18] sm:$0xff]
    %v847 = vld [vmem:[#allocation8 + $0xb20] sm:$0xff]
    %v848 = vld [vmem:[#allocation8 + $0xb28] sm:$0xff]
    %v849 = vld [vmem:[#allocation8 + $0xb30] sm:$0xff]
    %v850 = vld [vmem:[#allocation8 + $0xb38] sm:$0xff]
    %v851 = vld [vmem:[#allocation8 + $0xb40] sm:$0xff]
    %v852 = vld [vmem:[#allocation8 + $0xb48] sm:$0xff]
    %v853 = vld [vmem:[#allocation8 + $0xb50] sm:$0xff]
    %v854 = vld [vmem:[#allocation8 + $0xb58] sm:$0xff]
    %v855 = vld [vmem:[#allocation8 + $0xb60] sm:$0xff]
    %v856 = vld [vmem:[#allocation8 + $0xb68] sm:$0xff]
    %v857 = vld [vmem:[#allocation8 + $0xb70] sm:$0xff]
    %v858 = vld [vmem:[#allocation8 + $0xb78] sm:$0xff]
    %v859 = vld [vmem:[#allocation8 + $0xb80] sm:$0xff]
    %v860 = vld [vmem:[#allocation8 + $0xb88] sm:$0xff]
    %v861 = vld [vmem:[#allocation8 + $0xb90] sm:$0xff]
    %v862 = vld [vmem:[#allocation8 + $0xb98] sm:$0xff]
    %v863 = vld [vmem:[#allocation8 + $0xba0] sm:$0xff]
    %v864 = vld [vmem:[#allocation8 + $0xba8] sm:$0xff]
    %v865 = vld [vmem:[#allocation8 + $0xbb0] sm:$0xff]
    %v866 = vld [vmem:[#allocation8 + $0xbb8] sm:$0xff]
    %v867 = vld [vmem:[#allocation8 + $0xbc0] sm:$0xff]
    %v868 = vld [vmem:[#allocation8 + $0xbc8] sm:$0xff]
    %v869 = vld [vmem:[#allocation8 + $0xbd0] sm:$0xff]
    %v870 = vld [vmem:[#allocation8 + $0xbd8] sm:$0xff]
    %v871 = vld [vmem:[#allocation8 + $0xbe0] sm:$0xff]
    %v872 = vld [vmem:[#allocation8 + $0xbe8] sm:$0xff]
    %v873 = vld [vmem:[#allocation8 + $0xbf0] sm:$0xff]
    %v874 = vld [vmem:[#allocation8 + $0xbf8] sm:$0xff]
    %v875 = vld [vmem:[#allocation8 + $0xc00] sm:$0xff]
    %v876 = vld [vmem:[#allocation8 + $0xc08] sm:$0xff]
    %v877 = vld [vmem:[#allocation8 + $0xc10] sm:$0xff]
    %v878 = vld [vmem:[#allocation8 + $0xc18] sm:$0xff]
    %v879 = vld [vmem:[#allocation8 + $0xc20] sm:$0xff]
    %v880 = vld [vmem:[#allocation8 + $0xc28] sm:$0xff]
    %v881 = vld [vmem:[#allocation8 + $0xc30] sm:$0xff]
    %v882 = vld [vmem:[#allocation8 + $0xc38] sm:$0xff]
    %v883 = vld [vmem:[#allocation8 + $0xc40] sm:$0xff]
    %v884 = vld [vmem:[#allocation8 + $0xc48] sm:$0xff]
    %v885 = vld [vmem:[#allocation8 + $0xc50] sm:$0xff]
    %v886 = vld [vmem:[#allocation8 + $0xc58] sm:$0xff]
    %v887 = vld [vmem:[#allocation8 + $0xc60] sm:$0xff]
    %v888 = vld [vmem:[#allocation8 + $0xc68] sm:$0xff]
    %v889 = vld [vmem:[#allocation8 + $0xc70] sm:$0xff]
    %v890 = vld [vmem:[#allocation8 + $0xc78] sm:$0xff]
    %v891 = vld [vmem:[#allocation8 + $0xc80] sm:$0xff]
    %v892 = vld [vmem:[#allocation8 + $0xc88] sm:$0xff]
    %v893 = vld [vmem:[#allocation8 + $0xc90] sm:$0xff]
    %v894 = vld [vmem:[#allocation8 + $0xc98] sm:$0xff]
    %v895 = vld [vmem:[#allocation8 + $0xca0] sm:$0xff]
    %v896 = vld [vmem:[#allocation8 + $0xca8] sm:$0xff]
    %v897 = vld [vmem:[#allocation8 + $0xcb0] sm:$0xff]
    %v898 = vld [vmem:[#allocation8 + $0xcb8] sm:$0xff]
    %v899 = vld [vmem:[#allocation8 + $0xcc0] sm:$0xff]
    %v900 = vld [vmem:[#allocation8 + $0xcc8] sm:$0xff]
    %v901 = vld [vmem:[#allocation8 + $0xcd0] sm:$0xff]
    %v902 = vld [vmem:[#allocation8 + $0xcd8] sm:$0xff]
    %v903 = vld [vmem:[#allocation8 + $0xce0] sm:$0xff]
    %v904 = vld [vmem:[#allocation8 + $0xce8] sm:$0xff]
    %v905 = vld [vmem:[#allocation8 + $0xcf0] sm:$0xff]
    %v906 = vld [vmem:[#allocation8 + $0xcf8] sm:$0xff]
    %v907 = vld [vmem:[#allocation8 + $0xd00] sm:$0xff]
    %v908 = vld [vmem:[#allocation8 + $0xd08] sm:$0xff]
    %v909 = vld [vmem:[#allocation8 + $0xd10] sm:$0xff]
    %v910 = vld [vmem:[#allocation8 + $0xd18] sm:$0xff]
    %v911 = vld [vmem:[#allocation8 + $0xd20] sm:$0xff]
    %v912 = vld [vmem:[#allocation8 + $0xd28] sm:$0xff]
    %v913 = vld [vmem:[#allocation8 + $0xd30] sm:$0xff]
    %v914 = vld [vmem:[#allocation8 + $0xd38] sm:$0xff]
    %v915 = vld [vmem:[#allocation8 + $0xd40] sm:$0xff]
    %v916 = vld [vmem:[#allocation8 + $0xd48] sm:$0xff]
    %v917 = vld [vmem:[#allocation8 + $0xd50] sm:$0xff]
    %v918 = vld [vmem:[#allocation8 + $0xd58] sm:$0xff]
    %v919 = vld [vmem:[#allocation8 + $0xd60] sm:$0xff]
    %v920 = vld [vmem:[#allocation8 + $0xd68] sm:$0xff]
    %v921 = vld [vmem:[#allocation8 + $0xd70] sm:$0xff]
    %v922 = vld [vmem:[#allocation8 + $0xd78] sm:$0xff]
    %v923 = vld [vmem:[#allocation8 + $0xd80] sm:$0xff]
    %v924 = vld [vmem:[#allocation8 + $0xd88] sm:$0xff]
    %v925 = vld [vmem:[#allocation8 + $0xd90] sm:$0xff]
    %v926 = vld [vmem:[#allocation8 + $0xd98] sm:$0xff]
    %v927 = vld [vmem:[#allocation8 + $0xda0] sm:$0xff]
    %v928 = vld [vmem:[#allocation8 + $0xda8] sm:$0xff]
    %v929 = vld [vmem:[#allocation8 + $0xdb0] sm:$0xff]
    %v930 = vld [vmem:[#allocation8 + $0xdb8] sm:$0xff]
    %v931 = vld [vmem:[#allocation8 + $0xdc0] sm:$0xff]
    %v932 = vld [vmem:[#allocation8 + $0xdc8] sm:$0xff]
    %v933 = vld [vmem:[#allocation8 + $0xdd0] sm:$0xff]
    %v934 = vld [vmem:[#allocation8 + $0xdd8] sm:$0xff]
    %v935 = vld [vmem:[#allocation8 + $0xde0] sm:$0xff]
    %v936 = vld [vmem:[#allocation8 + $0xde8] sm:$0xff]
    %v937 = vld [vmem:[#allocation8 + $0xdf0] sm:$0xff]
    %v938 = vld [vmem:[#allocation8 + $0xdf8] sm:$0xff]
    %v939 = vld [vmem:[#allocation8 + $0xe00] sm:$0xff]
    %v940 = vld [vmem:[#allocation8 + $0xe08] sm:$0xff]
    %v941 = vld [vmem:[#allocation8 + $0xe10] sm:$0xff]
    %v942 = vld [vmem:[#allocation8 + $0xe18] sm:$0xff]
    %v943 = vld [vmem:[#allocation8 + $0xe20] sm:$0xff]
    %v944 = vld [vmem:[#allocation8 + $0xe28] sm:$0xff]
    %v945 = vld [vmem:[#allocation8 + $0xe30] sm:$0xff]
    %v946 = vld [vmem:[#allocation8 + $0xe38] sm:$0xff]
    %v947 = vld [vmem:[#allocation8 + $0xe40] sm:$0xff]
    %v948 = vld [vmem:[#allocation8 + $0xe48] sm:$0xff]
    %v949 = vld [vmem:[#allocation8 + $0xe50] sm:$0xff]
    %v950 = vld [vmem:[#allocation8 + $0xe58] sm:$0xff]
    %v951 = vld [vmem:[#allocation8 + $0xe60] sm:$0xff]
    %v952 = vld [vmem:[#allocation8 + $0xe68] sm:$0xff]
    %v953 = vld [vmem:[#allocation8 + $0xe70] sm:$0xff]
    %v954 = vld [vmem:[#allocation8 + $0xe78] sm:$0xff]
    %v955 = vld [vmem:[#allocation8 + $0xe80] sm:$0xff]
    %v956 = vld [vmem:[#allocation8 + $0xe88] sm:$0xff]
    %v957 = vld [vmem:[#allocation8 + $0xe90] sm:$0xff]
    %v958 = vld [vmem:[#allocation8 + $0xe98] sm:$0xff]
    %v959 = vld [vmem:[#allocation8 + $0xea0] sm:$0xff]
    %v960 = vld [vmem:[#allocation8 + $0xea8] sm:$0xff]
    %v961 = vld [vmem:[#allocation8 + $0xeb0] sm:$0xff]
    %v962 = vld [vmem:[#allocation8 + $0xeb8] sm:$0xff]
    %v963 = vld [vmem:[#allocation8 + $0xec0] sm:$0xff]
    %v964 = vld [vmem:[#allocation8 + $0xec8] sm:$0xff]
    %v965 = vld [vmem:[#allocation8 + $0xed0] sm:$0xff]
    %v966 = vld [vmem:[#allocation8 + $0xed8] sm:$0xff]
    %v967 = vld [vmem:[#allocation8 + $0xee0] sm:$0xff]
    %v968 = vld [vmem:[#allocation8 + $0xee8] sm:$0xff]
    %v969 = vld [vmem:[#allocation8 + $0xef0] sm:$0xff]
    %v970 = vld [vmem:[#allocation8 + $0xef8] sm:$0xff]
    %v971 = vld [vmem:[#allocation8 + $0xf00] sm:$0xff]
    %v972 = vld [vmem:[#allocation8 + $0xf08] sm:$0xff]
    %v973 = vld [vmem:[#allocation8 + $0xf10] sm:$0xff]
    %v974 = vld [vmem:[#allocation8 + $0xf18] sm:$0xff]
    %v975 = vld [vmem:[#allocation8 + $0xf20] sm:$0xff]
    %v976 = vld [vmem:[#allocation8 + $0xf28] sm:$0xff]
    %v977 = vld [vmem:[#allocation8 + $0xf30] sm:$0xff]
    %v978 = vld [vmem:[#allocation8 + $0xf38] sm:$0xff]
    %v979 = vld [vmem:[#allocation8 + $0xf40] sm:$0xff]
    %v980 = vld [vmem:[#allocation8 + $0xf48] sm:$0xff]
    %v981 = vld [vmem:[#allocation8 + $0xf50] sm:$0xff]
    %v982 = vld [vmem:[#allocation8 + $0xf58] sm:$0xff]
    %v983 = vld [vmem:[#allocation8 + $0xf60] sm:$0xff]
    %v984 = vld [vmem:[#allocation8 + $0xf68] sm:$0xff]
    %v985 = vld [vmem:[#allocation8 + $0xf70] sm:$0xff]
    %v986 = vld [vmem:[#allocation8 + $0xf78] sm:$0xff]
    %v987 = vld [vmem:[#allocation8 + $0xf80] sm:$0xff]
    %v988 = vld [vmem:[#allocation8 + $0xf88] sm:$0xff]
    %v989 = vld [vmem:[#allocation8 + $0xf90] sm:$0xff]
    %v990 = vld [vmem:[#allocation8 + $0xf98] sm:$0xff]
    %v991 = vld [vmem:[#allocation8 + $0xfa0] sm:$0xff]
    %v992 = vld [vmem:[#allocation8 + $0xfa8] sm:$0xff]
    %v993 = vld [vmem:[#allocation8 + $0xfb0] sm:$0xff]
    %v994 = vld [vmem:[#allocation8 + $0xfb8] sm:$0xff]
    %v995 = vld [vmem:[#allocation8 + $0xfc0] sm:$0xff]
    %v996 = vld [vmem:[#allocation8 + $0xfc8] sm:$0xff]
    %v997 = vld [vmem:[#allocation8 + $0xfd0] sm:$0xff]
    %v998 = vld [vmem:[#allocation8 + $0xfd8] sm:$0xff]
    %v999 = vld [vmem:[#allocation8 + $0xfe0] sm:$0xff]
    %v1000 = vld [vmem:[#allocation8 + $0xfe8] sm:$0xff]
    %v1001 = vld [vmem:[#allocation8 + $0xff0] sm:$0xff]
    %v1002 = vld [vmem:[#allocation8 + $0xff8] sm:$0xff]
    %v1003 = vld [vmem:[#allocation10] sm:$0xf]
    %v1005 = vlaneseq
    %v1006 = vshrl.u32 %v1005, 7
    %v1007 = vsub.s32 0, %v1006
    %v1008 = vrot.slane %v1003, %v1007
    %v1009 = vlaneseq
    %v1010 = vshrl.u32 %v1009, 7
    %v1011 = vsub.s32 1, %v1010
    %v1012 = vrot.slane %v1003, %v1011
    %v1013 = vlaneseq
    %v1014 = vshrl.u32 %v1013, 7
    %v1015 = vsub.s32 2, %v1014
    %v1016 = vrot.slane %v1003, %v1015
    %v1017 = vlaneseq
    %v1018 = vshrl.u32 %v1017, 7
    %v1019 = vsub.s32 3, %v1018
    %v1020 = vrot.slane %v1003, %v1019
    %1025 = vmatprep.subr.mxu0 %v552
    %1026 = vmatpush1.msra.mxu0 %v551
    %1027 = vmatprep.subr.mxu0 %v548
    %1028 = vmatpush1.msra.mxu0 %v547
    %1029 = vmatprep.subr.mxu0 %v544
    %1030 = vmatpush1.msra.mxu0 %v543
    %1031 = vmatprep.subr.mxu0 %v540
    %1032 = vmatpush1.msra.mxu0 %v539
    %1033 = vmatprep.subr.mxu0 %v536
    %1034 = vmatpush1.msra.mxu0 %v535
    %1035 = vmatprep.subr.mxu0 %v532
    %1036 = vmatpush1.msra.mxu0 %v531
    %1037 = vmatprep.subr.mxu0 %v528
    %1038 = vmatpush1.msra.mxu0 %v527
    %1039 = vmatprep.subr.mxu0 %v524
    %1040 = vmatpush1.msra.mxu0 %v523
    %1041 = vmatprep.subr.mxu0 %v520
    %1042 = vmatpush1.msra.mxu0 %v519
    %1043 = vmatprep.subr.mxu0 %v516
    %1044 = vmatpush1.msra.mxu0 %v515
    %1045 = vmatprep.subr.mxu0 %v512
    %1046 = vmatpush1.msra.mxu0 %v511
    %1047 = vmatprep.subr.mxu0 %v508
    %1048 = vmatpush1.msra.mxu0 %v507
    %1049 = vmatprep.subr.mxu0 %v504
    %1050 = vmatpush1.msra.mxu0 %v503
    %1051 = vmatprep.subr.mxu0 %v500
    %1052 = vmatpush1.msra.mxu0 %v499
    %1053 = vmatprep.subr.mxu0 %v496
    %1054 = vmatpush1.msra.mxu0 %v495
    %1055 = vmatprep.subr.mxu0 %v492
    %1056 = vmatpush1.msra.mxu0 %v491
    %1057 = vmatprep.subr.mxu0 %v616
    %1058 = vmatpush2.msra.mxu0 %v615
    %1059 = vmatprep.subr.mxu0 %v612
    %1060 = vmatpush2.msra.mxu0 %v611
    %1061 = vmatprep.subr.mxu0 %v608
    %1062 = vmatpush2.msra.mxu0 %v607
    %1063 = vmatprep.subr.mxu0 %v604
    %1064 = vmatpush2.msra.mxu0 %v603
    %1065 = vmatprep.subr.mxu0 %v600
    %1066 = vmatpush2.msra.mxu0 %v599
    %1067 = vmatprep.subr.mxu0 %v596
    %1068 = vmatpush2.msra.mxu0 %v595
    %1069 = vmatprep.subr.mxu0 %v592
    %1070 = vmatpush2.msra.mxu0 %v591
    %1071 = vmatprep.subr.mxu0 %v588
    %1072 = vmatpush2.msra.mxu0 %v587
    %1073 = vmatprep.subr.mxu0 %v584
    %1074 = vmatpush2.msra.mxu0 %v583
    %1075 = vmatprep.subr.mxu0 %v580
    %1076 = vmatpush2.msra.mxu0 %v579
    %1077 = vmatprep.subr.mxu0 %v576
    %1078 = vmatpush2.msra.mxu0 %v575
    %1079 = vmatprep.subr.mxu0 %v572
    %1080 = vmatpush2.msra.mxu0 %v571
    %1081 = vmatprep.subr.mxu0 %v568
    %1082 = vmatpush2.msra.mxu0 %v567
    %1083 = vmatprep.subr.mxu0 %v564
    %1084 = vmatpush2.msra.mxu0 %v563
    %1085 = vmatprep.subr.mxu0 %v560
    %1086 = vmatpush2.msra.mxu0 %v559
    %1087 = vmatprep.subr.mxu0 %v556
    %1088 = vmatpush2.msra.mxu0 %v555
    %1089 = vmatprep.mubr.f32.mxu0 %v484
    %1090 = vmatmul.mubr.f32.gmra.mxu0 %v483
    %v1091 = vpop.f32.mrf.mxu0
    %v1092 = vadd.f32 %v1008, %v1091
    %v1093 = vpop.f32.mrf.mxu0
    %v1094 = vadd.f32 %v1012, %v1093
    %1095 = vdwg.mxu0
    %1096 = vmatprep.subr.mxu0 %v680
    %1097 = vmatpush1.msra.mxu0 %v679
    %1098 = vmatprep.subr.mxu0 %v676
    %1099 = vmatpush1.msra.mxu0 %v675
    %1100 = vmatprep.subr.mxu0 %v672
    %1101 = vmatpush1.msra.mxu0 %v671
    %1102 = vmatprep.subr.mxu0 %v668
    %1103 = vmatpush1.msra.mxu0 %v667
    %1104 = vmatprep.subr.mxu0 %v664
    %1105 = vmatpush1.msra.mxu0 %v663
    %1106 = vmatprep.subr.mxu0 %v660
    %1107 = vmatpush1.msra.mxu0 %v659
    %1108 = vmatprep.subr.mxu0 %v656
    %1109 = vmatpush1.msra.mxu0 %v655
    %1110 = vmatprep.subr.mxu0 %v652
    %1111 = vmatpush1.msra.mxu0 %v651
    %1112 = vmatprep.subr.mxu0 %v648
    %1113 = vmatpush1.msra.mxu0 %v647
    %1114 = vmatprep.subr.mxu0 %v644
    %1115 = vmatpush1.msra.mxu0 %v643
    %1116 = vmatprep.subr.mxu0 %v640
    %1117 = vmatpush1.msra.mxu0 %v639
    %1118 = vmatprep.subr.mxu0 %v636
    %1119 = vmatpush1.msra.mxu0 %v635
    %1120 = vmatprep.subr.mxu0 %v632
    %1121 = vmatpush1.msra.mxu0 %v631
    %1122 = vmatprep.subr.mxu0 %v628
    %1123 = vmatpush1.msra.mxu0 %v627
    %1124 = vmatprep.subr.mxu0 %v624
    %1125 = vmatpush1.msra.mxu0 %v623
    %1126 = vmatprep.subr.mxu0 %v620
    %1127 = vmatpush1.msra.mxu0 %v619
    %1128 = vmatprep.subr.mxu0 %v744
    %1129 = vmatpush2.msra.mxu0 %v743
    %1130 = vmatprep.subr.mxu0 %v740
    %1131 = vmatpush2.msra.mxu0 %v739
    %1132 = vmatprep.subr.mxu0 %v736
    %1133 = vmatpush2.msra.mxu0 %v735
    %1134 = vmatprep.subr.mxu0 %v732
    %1135 = vmatpush2.msra.mxu0 %v731
    %1136 = vmatprep.subr.mxu0 %v728
    %1137 = vmatpush2.msra.mxu0 %v727
    %1138 = vmatprep.subr.mxu0 %v724
    %1139 = vmatpush2.msra.mxu0 %v723
    %1140 = vmatprep.subr.mxu0 %v720
    %1141 = vmatpush2.msra.mxu0 %v719
    %1142 = vmatprep.subr.mxu0 %v716
    %1143 = vmatpush2.msra.mxu0 %v715
    %1144 = vmatprep.subr.mxu0 %v712
    %1145 = vmatpush2.msra.mxu0 %v711
    %1146 = vmatprep.subr.mxu0 %v708
    %1147 = vmatpush2.msra.mxu0 %v707
    %1148 = vmatprep.subr.mxu0 %v704
    %1149 = vmatpush2.msra.mxu0 %v703
    %1150 = vmatprep.subr.mxu0 %v700
    %1151 = vmatpush2.msra.mxu0 %v699
    %1152 = vmatprep.subr.mxu0 %v696
    %1153 = vmatpush2.msra.mxu0 %v695
    %1154 = vmatprep.subr.mxu0 %v692
    %1155 = vmatpush2.msra.mxu0 %v691
    %1156 = vmatprep.subr.mxu0 %v688
    %1157 = vmatpush2.msra.mxu0 %v687
    %1158 = vmatprep.subr.mxu0 %v684
    %1159 = vmatpush2.msra.mxu0 %v683
    %1160 = vmatprep.mubr.f32.mxu0 %v486
    %1161 = vmatmul.mubr.f32.gmra.mxu0 %v485
    %v1162 = vpop.f32.mrf.mxu0
    %v1163 = vadd.f32 %v1092, %v1162
    %v1164 = vpop.f32.mrf.mxu0
    %v1165 = vadd.f32 %v1094, %v1164
    %1166 = vdwg.mxu0
    %1167 = vmatprep.subr.mxu0 %v808
    %1168 = vmatpush1.msra.mxu0 %v807
    %1169 = vmatprep.subr.mxu0 %v804
    %1170 = vmatpush1.msra.mxu0 %v803
    %1171 = vmatprep.subr.mxu0 %v800
    %1172 = vmatpush1.msra.mxu0 %v799
    %1173 = vmatprep.subr.mxu0 %v796
    %1174 = vmatpush1.msra.mxu0 %v795
    %1175 = vmatprep.subr.mxu0 %v792
    %1176 = vmatpush1.msra.mxu0 %v791
    %1177 = vmatprep.subr.mxu0 %v788
    %1178 = vmatpush1.msra.mxu0 %v787
    %1179 = vmatprep.subr.mxu0 %v784
    %1180 = vmatpush1.msra.mxu0 %v783
    %1181 = vmatprep.subr.mxu0 %v780
    %1182 = vmatpush1.msra.mxu0 %v779
    %1183 = vmatprep.subr.mxu0 %v776
    %1184 = vmatpush1.msra.mxu0 %v775
    %1185 = vmatprep.subr.mxu0 %v772
    %1186 = vmatpush1.msra.mxu0 %v771
    %1187 = vmatprep.subr.mxu0 %v768
    %1188 = vmatpush1.msra.mxu0 %v767
    %1189 = vmatprep.subr.mxu0 %v764
    %1190 = vmatpush1.msra.mxu0 %v763
    %1191 = vmatprep.subr.mxu0 %v760
    %1192 = vmatpush1.msra.mxu0 %v759
    %1193 = vmatprep.subr.mxu0 %v756
    %1194 = vmatpush1.msra.mxu0 %v755
    %1195 = vmatprep.subr.mxu0 %v752
    %1196 = vmatpush1.msra.mxu0 %v751
    %1197 = vmatprep.subr.mxu0 %v748
    %1198 = vmatpush1.msra.mxu0 %v747
    %1199 = vmatprep.subr.mxu0 %v872
    %1200 = vmatpush2.msra.mxu0 %v871
    %1201 = vmatprep.subr.mxu0 %v868
    %1202 = vmatpush2.msra.mxu0 %v867
    %1203 = vmatprep.subr.mxu0 %v864
    %1204 = vmatpush2.msra.mxu0 %v863
    %1205 = vmatprep.subr.mxu0 %v860
    %1206 = vmatpush2.msra.mxu0 %v859
    %1207 = vmatprep.subr.mxu0 %v856
    %1208 = vmatpush2.msra.mxu0 %v855
    %1209 = vmatprep.subr.mxu0 %v852
    %1210 = vmatpush2.msra.mxu0 %v851
    %1211 = vmatprep.subr.mxu0 %v848
    %1212 = vmatpush2.msra.mxu0 %v847
    %1213 = vmatprep.subr.mxu0 %v844
    %1214 = vmatpush2.msra.mxu0 %v843
    %1215 = vmatprep.subr.mxu0 %v840
    %1216 = vmatpush2.msra.mxu0 %v839
    %1217 = vmatprep.subr.mxu0 %v836
    %1218 = vmatpush2.msra.mxu0 %v835
    %1219 = vmatprep.subr.mxu0 %v832
    %1220 = vmatpush2.msra.mxu0 %v831
    %1221 = vmatprep.subr.mxu0 %v828
    %1222 = vmatpush2.msra.mxu0 %v827
    %1223 = vmatprep.subr.mxu0 %v824
    %1224 = vmatpush2.msra.mxu0 %v823
    %1225 = vmatprep.subr.mxu0 %v820
    %1226 = vmatpush2.msra.mxu0 %v819
    %1227 = vmatprep.subr.mxu0 %v816
    %1228 = vmatpush2.msra.mxu0 %v815
    %1229 = vmatprep.subr.mxu0 %v812
    %1230 = vmatpush2.msra.mxu0 %v811
    %1231 = vmatprep.mubr.f32.mxu0 %v488
    %1232 = vmatmul.mubr.f32.gmra.mxu0 %v487
    %v1233 = vpop.f32.mrf.mxu0
    %v1234 = vadd.f32 %v1163, %v1233
    %v1235 = vpop.f32.mrf.mxu0
    %v1236 = vadd.f32 %v1165, %v1235
    %1237 = vdwg.mxu0
    %1238 = vmatprep.subr.mxu0 %v936
    %1239 = vmatpush1.msra.mxu0 %v935
    %1240 = vmatprep.subr.mxu0 %v932
    %1241 = vmatpush1.msra.mxu0 %v931
    %1242 = vmatprep.subr.mxu0 %v928
    %1243 = vmatpush1.msra.mxu0 %v927
    %1244 = vmatprep.subr.mxu0 %v924
    %1245 = vmatpush1.msra.mxu0 %v923
    %1246 = vmatprep.subr.mxu0 %v920
    %1247 = vmatpush1.msra.mxu0 %v919
    %1248 = vmatprep.subr.mxu0 %v916
    %1249 = vmatpush1.msra.mxu0 %v915
    %1250 = vmatprep.subr.mxu0 %v912
    %1251 = vmatpush1.msra.mxu0 %v911
    %1252 = vmatprep.subr.mxu0 %v908
    %1253 = vmatpush1.msra.mxu0 %v907
    %1254 = vmatprep.subr.mxu0 %v904
    %1255 = vmatpush1.msra.mxu0 %v903
    %1256 = vmatprep.subr.mxu0 %v900
    %1257 = vmatpush1.msra.mxu0 %v899
    %1258 = vmatprep.subr.mxu0 %v896
    %1259 = vmatpush1.msra.mxu0 %v895
    %1260 = vmatprep.subr.mxu0 %v892
    %1261 = vmatpush1.msra.mxu0 %v891
    %1262 = vmatprep.subr.mxu0 %v888
    %1263 = vmatpush1.msra.mxu0 %v887
    %1264 = vmatprep.subr.mxu0 %v884
    %1265 = vmatpush1.msra.mxu0 %v883
    %1266 = vmatprep.subr.mxu0 %v880
    %1267 = vmatpush1.msra.mxu0 %v879
    %1268 = vmatprep.subr.mxu0 %v876
    %1269 = vmatpush1.msra.mxu0 %v875
    %1270 = vmatprep.subr.mxu0 %v1000
    %1271 = vmatpush2.msra.mxu0 %v999
    %1272 = vmatprep.subr.mxu0 %v996
    %1273 = vmatpush2.msra.mxu0 %v995
    %1274 = vmatprep.subr.mxu0 %v992
    %1275 = vmatpush2.msra.mxu0 %v991
    %1276 = vmatprep.subr.mxu0 %v988
    %1277 = vmatpush2.msra.mxu0 %v987
    %1278 = vmatprep.subr.mxu0 %v984
    %1279 = vmatpush2.msra.mxu0 %v983
    %1280 = vmatprep.subr.mxu0 %v980
    %1281 = vmatpush2.msra.mxu0 %v979
    %1282 = vmatprep.subr.mxu0 %v976
    %1283 = vmatpush2.msra.mxu0 %v975
    %1284 = vmatprep.subr.mxu0 %v972
    %1285 = vmatpush2.msra.mxu0 %v971
    %1286 = vmatprep.subr.mxu0 %v968
    %1287 = vmatpush2.msra.mxu0 %v967
    %1288 = vmatprep.subr.mxu0 %v964
    %1289 = vmatpush2.msra.mxu0 %v963
    %1290 = vmatprep.subr.mxu0 %v960
    %1291 = vmatpush2.msra.mxu0 %v959
    %1292 = vmatprep.subr.mxu0 %v956
    %1293 = vmatpush2.msra.mxu0 %v955
    %1294 = vmatprep.subr.mxu0 %v952
    %1295 = vmatpush2.msra.mxu0 %v951
    %1296 = vmatprep.subr.mxu0 %v948
    %1297 = vmatpush2.msra.mxu0 %v947
    %1298 = vmatprep.subr.mxu0 %v944
    %1299 = vmatpush2.msra.mxu0 %v943
    %1300 = vmatprep.subr.mxu0 %v940
    %1301 = vmatpush2.msra.mxu0 %v939
    %1302 = vmatprep.mubr.f32.mxu0 %v490
    %1303 = vmatmul.mubr.f32.gmra.mxu0 %v489
    %v1304 = vpop.f32.mrf.mxu0
    %v1305 = vadd.f32 %v1234, %v1304
    %v1306 = vpop.f32.mrf.mxu0
    %v1307 = vadd.f32 %v1236, %v1306
    %1308 = vdwg.mxu0
    %1309 = vmatprep.subr.mxu0 %v554
    %1310 = vmatpush1.msra.mxu0 %v553
    %1311 = vmatprep.subr.mxu0 %v550
    %1312 = vmatpush1.msra.mxu0 %v549
    %1313 = vmatprep.subr.mxu0 %v546
    %1314 = vmatpush1.msra.mxu0 %v545
    %1315 = vmatprep.subr.mxu0 %v542
    %1316 = vmatpush1.msra.mxu0 %v541
    %1317 = vmatprep.subr.mxu0 %v538
    %1318 = vmatpush1.msra.mxu0 %v537
    %1319 = vmatprep.subr.mxu0 %v534
    %1320 = vmatpush1.msra.mxu0 %v533
    %1321 = vmatprep.subr.mxu0 %v530
    %1322 = vmatpush1.msra.mxu0 %v529
    %1323 = vmatprep.subr.mxu0 %v526
    %1324 = vmatpush1.msra.mxu0 %v525
    %1325 = vmatprep.subr.mxu0 %v522
    %1326 = vmatpush1.msra.mxu0 %v521
    %1327 = vmatprep.subr.mxu0 %v518
    %1328 = vmatpush1.msra.mxu0 %v517
    %1329 = vmatprep.subr.mxu0 %v514
    %1330 = vmatpush1.msra.mxu0 %v513
    %1331 = vmatprep.subr.mxu0 %v510
    %1332 = vmatpush1.msra.mxu0 %v509
    %1333 = vmatprep.subr.mxu0 %v506
    %1334 = vmatpush1.msra.mxu0 %v505
    %1335 = vmatprep.subr.mxu0 %v502
    %1336 = vmatpush1.msra.mxu0 %v501
    %1337 = vmatprep.subr.mxu0 %v498
    %1338 = vmatpush1.msra.mxu0 %v497
    %1339 = vmatprep.subr.mxu0 %v494
    %1340 = vmatpush1.msra.mxu0 %v493
    %1341 = vmatprep.subr.mxu0 %v618
    %1342 = vmatpush2.msra.mxu0 %v617
    %1343 = vmatprep.subr.mxu0 %v614
    %1344 = vmatpush2.msra.mxu0 %v613
    %1345 = vmatprep.subr.mxu0 %v610
    %1346 = vmatpush2.msra.mxu0 %v609
    %1347 = vmatprep.subr.mxu0 %v606
    %1348 = vmatpush2.msra.mxu0 %v605
    %1349 = vmatprep.subr.mxu0 %v602
    %1350 = vmatpush2.msra.mxu0 %v601
    %1351 = vmatprep.subr.mxu0 %v598
    %1352 = vmatpush2.msra.mxu0 %v597
    %1353 = vmatprep.subr.mxu0 %v594
    %1354 = vmatpush2.msra.mxu0 %v593
    %1355 = vmatprep.subr.mxu0 %v590
    %1356 = vmatpush2.msra.mxu0 %v589
    %1357 = vmatprep.subr.mxu0 %v586
    %1358 = vmatpush2.msra.mxu0 %v585
    %1359 = vmatprep.subr.mxu0 %v582
    %1360 = vmatpush2.msra.mxu0 %v581
    %1361 = vmatprep.subr.mxu0 %v578
    %1362 = vmatpush2.msra.mxu0 %v577
    %1363 = vmatprep.subr.mxu0 %v574
    %1364 = vmatpush2.msra.mxu0 %v573
    %1365 = vmatprep.subr.mxu0 %v570
    %1366 = vmatpush2.msra.mxu0 %v569
    %1367 = vmatprep.subr.mxu0 %v566
    %1368 = vmatpush2.msra.mxu0 %v565
    %1369 = vmatprep.subr.mxu0 %v562
    %1370 = vmatpush2.msra.mxu0 %v561
    %1371 = vmatprep.subr.mxu0 %v558
    %1372 = vmatpush2.msra.mxu0 %v557
    %1373 = vmatprep.mubr.f32.mxu0 %v484
    %1374 = vmatmul.mubr.f32.gmra.mxu0 %v483
    %v1375 = vpop.f32.mrf.mxu0
    %v1376 = vadd.f32 %v1016, %v1375
    %v1377 = vpop.f32.mrf.mxu0
    %v1378 = vadd.f32 %v1020, %v1377
    %1379 = vdwg.mxu0
    %1380 = vmatprep.subr.mxu0 %v682
    %1381 = vmatpush1.msra.mxu0 %v681
    %1382 = vmatprep.subr.mxu0 %v678
    %1383 = vmatpush1.msra.mxu0 %v677
    %1384 = vmatprep.subr.mxu0 %v674
    %1385 = vmatpush1.msra.mxu0 %v673
    %1386 = vmatprep.subr.mxu0 %v670
    %1387 = vmatpush1.msra.mxu0 %v669
    %1388 = vmatprep.subr.mxu0 %v666
    %1389 = vmatpush1.msra.mxu0 %v665
    %1390 = vmatprep.subr.mxu0 %v662
    %1391 = vmatpush1.msra.mxu0 %v661
    %1392 = vmatprep.subr.mxu0 %v658
    %1393 = vmatpush1.msra.mxu0 %v657
    %1394 = vmatprep.subr.mxu0 %v654
    %1395 = vmatpush1.msra.mxu0 %v653
    %1396 = vmatprep.subr.mxu0 %v650
    %1397 = vmatpush1.msra.mxu0 %v649
    %1398 = vmatprep.subr.mxu0 %v646
    %1399 = vmatpush1.msra.mxu0 %v645
    %1400 = vmatprep.subr.mxu0 %v642
    %1401 = vmatpush1.msra.mxu0 %v641
    %1402 = vmatprep.subr.mxu0 %v638
    %1403 = vmatpush1.msra.mxu0 %v637
    %1404 = vmatprep.subr.mxu0 %v634
    %1405 = vmatpush1.msra.mxu0 %v633
    %1406 = vmatprep.subr.mxu0 %v630
    %1407 = vmatpush1.msra.mxu0 %v629
    %1408 = vmatprep.subr.mxu0 %v626
    %1409 = vmatpush1.msra.mxu0 %v625
    %1410 = vmatprep.subr.mxu0 %v622
    %1411 = vmatpush1.msra.mxu0 %v621
    %1412 = vmatprep.subr.mxu0 %v746
    %1413 = vmatpush2.msra.mxu0 %v745
    %1414 = vmatprep.subr.mxu0 %v742
    %1415 = vmatpush2.msra.mxu0 %v741
    %1416 = vmatprep.subr.mxu0 %v738
    %1417 = vmatpush2.msra.mxu0 %v737
    %1418 = vmatprep.subr.mxu0 %v734
    %1419 = vmatpush2.msra.mxu0 %v733
    %1420 = vmatprep.subr.mxu0 %v730
    %1421 = vmatpush2.msra.mxu0 %v729
    %1422 = vmatprep.subr.mxu0 %v726
    %1423 = vmatpush2.msra.mxu0 %v725
    %1424 = vmatprep.subr.mxu0 %v722
    %1425 = vmatpush2.msra.mxu0 %v721
    %1426 = vmatprep.subr.mxu0 %v718
    %1427 = vmatpush2.msra.mxu0 %v717
    %1428 = vmatprep.subr.mxu0 %v714
    %1429 = vmatpush2.msra.mxu0 %v713
    %1430 = vmatprep.subr.mxu0 %v710
    %1431 = vmatpush2.msra.mxu0 %v709
    %1432 = vmatprep.subr.mxu0 %v706
    %1433 = vmatpush2.msra.mxu0 %v705
    %1434 = vmatprep.subr.mxu0 %v702
    %1435 = vmatpush2.msra.mxu0 %v701
    %1436 = vmatprep.subr.mxu0 %v698
    %1437 = vmatpush2.msra.mxu0 %v697
    %1438 = vmatprep.subr.mxu0 %v694
    %1439 = vmatpush2.msra.mxu0 %v693
    %1440 = vmatprep.subr.mxu0 %v690
    %1441 = vmatpush2.msra.mxu0 %v689
    %1442 = vmatprep.subr.mxu0 %v686
    %1443 = vmatpush2.msra.mxu0 %v685
    %1444 = vmatprep.mubr.f32.mxu0 %v486
    %1445 = vmatmul.mubr.f32.gmra.mxu0 %v485
    %v1446 = vpop.f32.mrf.mxu0
    %v1447 = vadd.f32 %v1376, %v1446
    %v1448 = vpop.f32.mrf.mxu0
    %v1449 = vadd.f32 %v1378, %v1448
    %1450 = vdwg.mxu0
    %1451 = vmatprep.subr.mxu0 %v810
    %1452 = vmatpush1.msra.mxu0 %v809
    %1453 = vmatprep.subr.mxu0 %v806
    %1454 = vmatpush1.msra.mxu0 %v805
    %1455 = vmatprep.subr.mxu0 %v802
    %1456 = vmatpush1.msra.mxu0 %v801
    %1457 = vmatprep.subr.mxu0 %v798
    %1458 = vmatpush1.msra.mxu0 %v797
    %1459 = vmatprep.subr.mxu0 %v794
    %1460 = vmatpush1.msra.mxu0 %v793
    %1461 = vmatprep.subr.mxu0 %v790
    %1462 = vmatpush1.msra.mxu0 %v789
    %1463 = vmatprep.subr.mxu0 %v786
    %1464 = vmatpush1.msra.mxu0 %v785
    %1465 = vmatprep.subr.mxu0 %v782
    %1466 = vmatpush1.msra.mxu0 %v781
    %1467 = vmatprep.subr.mxu0 %v778
    %1468 = vmatpush1.msra.mxu0 %v777
    %1469 = vmatprep.subr.mxu0 %v774
    %1470 = vmatpush1.msra.mxu0 %v773
    %1471 = vmatprep.subr.mxu0 %v770
    %1472 = vmatpush1.msra.mxu0 %v769
    %1473 = vmatprep.subr.mxu0 %v766
    %1474 = vmatpush1.msra.mxu0 %v765
    %1475 = vmatprep.subr.mxu0 %v762
    %1476 = vmatpush1.msra.mxu0 %v761
    %1477 = vmatprep.subr.mxu0 %v758
    %1478 = vmatpush1.msra.mxu0 %v757
    %1479 = vmatprep.subr.mxu0 %v754
    %1480 = vmatpush1.msra.mxu0 %v753
    %1481 = vmatprep.subr.mxu0 %v750
    %1482 = vmatpush1.msra.mxu0 %v749
    %1483 = vmatprep.subr.mxu0 %v874
    %1484 = vmatpush2.msra.mxu0 %v873
    %1485 = vmatprep.subr.mxu0 %v870
    %1486 = vmatpush2.msra.mxu0 %v869
    %1487 = vmatprep.subr.mxu0 %v866
    %1488 = vmatpush2.msra.mxu0 %v865
    %1489 = vmatprep.subr.mxu0 %v862
    %1490 = vmatpush2.msra.mxu0 %v861
    %1491 = vmatprep.subr.mxu0 %v858
    %1492 = vmatpush2.msra.mxu0 %v857
    %1493 = vmatprep.subr.mxu0 %v854
    %1494 = vmatpush2.msra.mxu0 %v853
    %1495 = vmatprep.subr.mxu0 %v850
    %1496 = vmatpush2.msra.mxu0 %v849
    %1497 = vmatprep.subr.mxu0 %v846
    %1498 = vmatpush2.msra.mxu0 %v845
    %1499 = vmatprep.subr.mxu0 %v842
    %1500 = vmatpush2.msra.mxu0 %v841
    %1501 = vmatprep.subr.mxu0 %v838
    %1502 = vmatpush2.msra.mxu0 %v837
    %1503 = vmatprep.subr.mxu0 %v834
    %1504 = vmatpush2.msra.mxu0 %v833
    %1505 = vmatprep.subr.mxu0 %v830
    %1506 = vmatpush2.msra.mxu0 %v829
    %1507 = vmatprep.subr.mxu0 %v826
    %1508 = vmatpush2.msra.mxu0 %v825
    %1509 = vmatprep.subr.mxu0 %v822
    %1510 = vmatpush2.msra.mxu0 %v821
    %1511 = vmatprep.subr.mxu0 %v818
    %1512 = vmatpush2.msra.mxu0 %v817
    %1513 = vmatprep.subr.mxu0 %v814
    %1514 = vmatpush2.msra.mxu0 %v813
    %1515 = vmatprep.mubr.f32.mxu0 %v488
    %1516 = vmatmul.mubr.f32.gmra.mxu0 %v487
    %v1517 = vpop.f32.mrf.mxu0
    %v1518 = vadd.f32 %v1447, %v1517
    %v1519 = vpop.f32.mrf.mxu0
    %v1520 = vadd.f32 %v1449, %v1519
    %1521 = vdwg.mxu0
    %1522 = vmatprep.subr.mxu0 %v938
    %1523 = vmatpush1.msra.mxu0 %v937
    %1524 = vmatprep.subr.mxu0 %v934
    %1525 = vmatpush1.msra.mxu0 %v933
    %1526 = vmatprep.subr.mxu0 %v930
    %1527 = vmatpush1.msra.mxu0 %v929
    %1528 = vmatprep.subr.mxu0 %v926
    %1529 = vmatpush1.msra.mxu0 %v925
    %1530 = vmatprep.subr.mxu0 %v922
    %1531 = vmatpush1.msra.mxu0 %v921
    %1532 = vmatprep.subr.mxu0 %v918
    %1533 = vmatpush1.msra.mxu0 %v917
    %1534 = vmatprep.subr.mxu0 %v914
    %1535 = vmatpush1.msra.mxu0 %v913
    %1536 = vmatprep.subr.mxu0 %v910
    %1537 = vmatpush1.msra.mxu0 %v909
    %1538 = vmatprep.subr.mxu0 %v906
    %1539 = vmatpush1.msra.mxu0 %v905
    %1540 = vmatprep.subr.mxu0 %v902
    %1541 = vmatpush1.msra.mxu0 %v901
    %1542 = vmatprep.subr.mxu0 %v898
    %1543 = vmatpush1.msra.mxu0 %v897
    %1544 = vmatprep.subr.mxu0 %v894
    %1545 = vmatpush1.msra.mxu0 %v893
    %1546 = vmatprep.subr.mxu0 %v890
    %1547 = vmatpush1.msra.mxu0 %v889
    %1548 = vmatprep.subr.mxu0 %v886
    %1549 = vmatpush1.msra.mxu0 %v885
    %1550 = vmatprep.subr.mxu0 %v882
    %1551 = vmatpush1.msra.mxu0 %v881
    %1552 = vmatprep.subr.mxu0 %v878
    %1553 = vmatpush1.msra.mxu0 %v877
    %1554 = vmatprep.subr.mxu0 %v1002
    %1555 = vmatpush2.msra.mxu0 %v1001
    %1556 = vmatprep.subr.mxu0 %v998
    %1557 = vmatpush2.msra.mxu0 %v997
    %1558 = vmatprep.subr.mxu0 %v994
    %1559 = vmatpush2.msra.mxu0 %v993
    %1560 = vmatprep.subr.mxu0 %v990
    %1561 = vmatpush2.msra.mxu0 %v989
    %1562 = vmatprep.subr.mxu0 %v986
    %1563 = vmatpush2.msra.mxu0 %v985
    %1564 = vmatprep.subr.mxu0 %v982
    %1565 = vmatpush2.msra.mxu0 %v981
    %1566 = vmatprep.subr.mxu0 %v978
    %1567 = vmatpush2.msra.mxu0 %v977
    %1568 = vmatprep.subr.mxu0 %v974
    %1569 = vmatpush2.msra.mxu0 %v973
    %1570 = vmatprep.subr.mxu0 %v970
    %1571 = vmatpush2.msra.mxu0 %v969
    %1572 = vmatprep.subr.mxu0 %v966
    %1573 = vmatpush2.msra.mxu0 %v965
    %1574 = vmatprep.subr.mxu0 %v962
    %1575 = vmatpush2.msra.mxu0 %v961
    %1576 = vmatprep.subr.mxu0 %v958
    %1577 = vmatpush2.msra.mxu0 %v957
    %1578 = vmatprep.subr.mxu0 %v954
    %1579 = vmatpush2.msra.mxu0 %v953
    %1580 = vmatprep.subr.mxu0 %v950
    %1581 = vmatpush2.msra.mxu0 %v949
    %1582 = vmatprep.subr.mxu0 %v946
    %1583 = vmatpush2.msra.mxu0 %v945
    %1584 = vmatprep.subr.mxu0 %v942
    %1585 = vmatpush2.msra.mxu0 %v941
    %1586 = vmatprep.mubr.f32.mxu0 %v490
    %1587 = vmatmul.mubr.f32.gmra.mxu0 %v489
    %v1588 = vpop.f32.mrf.mxu0
    %v1589 = vadd.f32 %v1518, %v1588
    %v1590 = vpop.f32.mrf.mxu0
    %v1591 = vadd.f32 %v1520, %v1590
    %1592 = vdwg.mxu0
    %v1593 = vmax.f32 %v1305, 0.0
    %v1594 = vmax.f32 %v1307, 0.0
    %v1595 = vmax.f32 %v1589, 0.0
    %v1596 = vmax.f32 %v1591, 0.0
    %v1597 = vld [vmem:[#allocation11] sm:$0xff]
    %v1598 = vld [vmem:[#allocation11 + $0x8] sm:$0xff]
    %v1599 = vld [vmem:[#allocation11 + $0x10] sm:$0xff]
    %v1600 = vld [vmem:[#allocation11 + $0x18] sm:$0xff]
    %v1601 = vld [vmem:[#allocation11 + $0x20] sm:$0xff]
    %v1602 = vld [vmem:[#allocation11 + $0x28] sm:$0xff]
    %v1603 = vld [vmem:[#allocation11 + $0x30] sm:$0xff]
    %v1604 = vld [vmem:[#allocation11 + $0x38] sm:$0xff]
    %v1605 = vld [vmem:[#allocation11 + $0x40] sm:$0xff]
    %v1606 = vld [vmem:[#allocation11 + $0x48] sm:$0xff]
    %v1607 = vld [vmem:[#allocation11 + $0x50] sm:$0xff]
    %v1608 = vld [vmem:[#allocation11 + $0x58] sm:$0xff]
    %v1609 = vld [vmem:[#allocation11 + $0x60] sm:$0xff]
    %v1610 = vld [vmem:[#allocation11 + $0x68] sm:$0xff]
    %v1611 = vld [vmem:[#allocation11 + $0x70] sm:$0xff]
    %v1612 = vld [vmem:[#allocation11 + $0x78] sm:$0xff]
    %v1613 = vld [vmem:[#allocation11 + $0x80] sm:$0xff]
    %v1614 = vld [vmem:[#allocation11 + $0x88] sm:$0xff]
    %v1615 = vld [vmem:[#allocation11 + $0x90] sm:$0xff]
    %v1616 = vld [vmem:[#allocation11 + $0x98] sm:$0xff]
    %v1617 = vld [vmem:[#allocation11 + $0xa0] sm:$0xff]
    %v1618 = vld [vmem:[#allocation11 + $0xa8] sm:$0xff]
    %v1619 = vld [vmem:[#allocation11 + $0xb0] sm:$0xff]
    %v1620 = vld [vmem:[#allocation11 + $0xb8] sm:$0xff]
    %v1621 = vld [vmem:[#allocation11 + $0xc0] sm:$0xff]
    %v1622 = vld [vmem:[#allocation11 + $0xc8] sm:$0xff]
    %v1623 = vld [vmem:[#allocation11 + $0xd0] sm:$0xff]
    %v1624 = vld [vmem:[#allocation11 + $0xd8] sm:$0xff]
    %v1625 = vld [vmem:[#allocation11 + $0xe0] sm:$0xff]
    %v1626 = vld [vmem:[#allocation11 + $0xe8] sm:$0xff]
    %v1627 = vld [vmem:[#allocation11 + $0xf0] sm:$0xff]
    %v1628 = vld [vmem:[#allocation11 + $0xf8] sm:$0xff]
    %v1629 = vld [vmem:[#allocation11 + $0x100] sm:$0xff]
    %v1630 = vld [vmem:[#allocation11 + $0x108] sm:$0xff]
    %v1631 = vld [vmem:[#allocation11 + $0x110] sm:$0xff]
    %v1632 = vld [vmem:[#allocation11 + $0x118] sm:$0xff]
    %v1633 = vld [vmem:[#allocation11 + $0x120] sm:$0xff]
    %v1634 = vld [vmem:[#allocation11 + $0x128] sm:$0xff]
    %v1635 = vld [vmem:[#allocation11 + $0x130] sm:$0xff]
    %v1636 = vld [vmem:[#allocation11 + $0x138] sm:$0xff]
    %v1637 = vld [vmem:[#allocation11 + $0x140] sm:$0xff]
    %v1638 = vld [vmem:[#allocation11 + $0x148] sm:$0xff]
    %v1639 = vld [vmem:[#allocation11 + $0x150] sm:$0xff]
    %v1640 = vld [vmem:[#allocation11 + $0x158] sm:$0xff]
    %v1641 = vld [vmem:[#allocation11 + $0x160] sm:$0xff]
    %v1642 = vld [vmem:[#allocation11 + $0x168] sm:$0xff]
    %v1643 = vld [vmem:[#allocation11 + $0x170] sm:$0xff]
    %v1644 = vld [vmem:[#allocation11 + $0x178] sm:$0xff]
    %v1645 = vld [vmem:[#allocation11 + $0x180] sm:$0xff]
    %v1646 = vld [vmem:[#allocation11 + $0x188] sm:$0xff]
    %v1647 = vld [vmem:[#allocation11 + $0x190] sm:$0xff]
    %v1648 = vld [vmem:[#allocation11 + $0x198] sm:$0xff]
    %v1649 = vld [vmem:[#allocation11 + $0x1a0] sm:$0xff]
    %v1650 = vld [vmem:[#allocation11 + $0x1a8] sm:$0xff]
    %v1651 = vld [vmem:[#allocation11 + $0x1b0] sm:$0xff]
    %v1652 = vld [vmem:[#allocation11 + $0x1b8] sm:$0xff]
    %v1653 = vld [vmem:[#allocation11 + $0x1c0] sm:$0xff]
    %v1654 = vld [vmem:[#allocation11 + $0x1c8] sm:$0xff]
    %v1655 = vld [vmem:[#allocation11 + $0x1d0] sm:$0xff]
    %v1656 = vld [vmem:[#allocation11 + $0x1d8] sm:$0xff]
    %v1657 = vld [vmem:[#allocation11 + $0x1e0] sm:$0xff]
    %v1658 = vld [vmem:[#allocation11 + $0x1e8] sm:$0xff]
    %v1659 = vld [vmem:[#allocation11 + $0x1f0] sm:$0xff]
    %v1660 = vld [vmem:[#allocation11 + $0x1f8] sm:$0xff]
    %v1661 = vld [vmem:[#allocation11 + $0x200] sm:$0xff]
    %v1662 = vld [vmem:[#allocation11 + $0x208] sm:$0xff]
    %v1663 = vld [vmem:[#allocation11 + $0x210] sm:$0xff]
    %v1664 = vld [vmem:[#allocation11 + $0x218] sm:$0xff]
    %v1665 = vld [vmem:[#allocation11 + $0x220] sm:$0xff]
    %v1666 = vld [vmem:[#allocation11 + $0x228] sm:$0xff]
    %v1667 = vld [vmem:[#allocation11 + $0x230] sm:$0xff]
    %v1668 = vld [vmem:[#allocation11 + $0x238] sm:$0xff]
    %v1669 = vld [vmem:[#allocation11 + $0x240] sm:$0xff]
    %v1670 = vld [vmem:[#allocation11 + $0x248] sm:$0xff]
    %v1671 = vld [vmem:[#allocation11 + $0x250] sm:$0xff]
    %v1672 = vld [vmem:[#allocation11 + $0x258] sm:$0xff]
    %v1673 = vld [vmem:[#allocation11 + $0x260] sm:$0xff]
    %v1674 = vld [vmem:[#allocation11 + $0x268] sm:$0xff]
    %v1675 = vld [vmem:[#allocation11 + $0x270] sm:$0xff]
    %v1676 = vld [vmem:[#allocation11 + $0x278] sm:$0xff]
    %v1677 = vld [vmem:[#allocation11 + $0x280] sm:$0xff]
    %v1678 = vld [vmem:[#allocation11 + $0x288] sm:$0xff]
    %v1679 = vld [vmem:[#allocation11 + $0x290] sm:$0xff]
    %v1680 = vld [vmem:[#allocation11 + $0x298] sm:$0xff]
    %v1681 = vld [vmem:[#allocation11 + $0x2a0] sm:$0xff]
    %v1682 = vld [vmem:[#allocation11 + $0x2a8] sm:$0xff]
    %v1683 = vld [vmem:[#allocation11 + $0x2b0] sm:$0xff]
    %v1684 = vld [vmem:[#allocation11 + $0x2b8] sm:$0xff]
    %v1685 = vld [vmem:[#allocation11 + $0x2c0] sm:$0xff]
    %v1686 = vld [vmem:[#allocation11 + $0x2c8] sm:$0xff]
    %v1687 = vld [vmem:[#allocation11 + $0x2d0] sm:$0xff]
    %v1688 = vld [vmem:[#allocation11 + $0x2d8] sm:$0xff]
    %v1689 = vld [vmem:[#allocation11 + $0x2e0] sm:$0xff]
    %v1690 = vld [vmem:[#allocation11 + $0x2e8] sm:$0xff]
    %v1691 = vld [vmem:[#allocation11 + $0x2f0] sm:$0xff]
    %v1692 = vld [vmem:[#allocation11 + $0x2f8] sm:$0xff]
    %v1693 = vld [vmem:[#allocation11 + $0x300] sm:$0xff]
    %v1694 = vld [vmem:[#allocation11 + $0x308] sm:$0xff]
    %v1695 = vld [vmem:[#allocation11 + $0x310] sm:$0xff]
    %v1696 = vld [vmem:[#allocation11 + $0x318] sm:$0xff]
    %v1697 = vld [vmem:[#allocation11 + $0x320] sm:$0xff]
    %v1698 = vld [vmem:[#allocation11 + $0x328] sm:$0xff]
    %v1699 = vld [vmem:[#allocation11 + $0x330] sm:$0xff]
    %v1700 = vld [vmem:[#allocation11 + $0x338] sm:$0xff]
    %v1701 = vld [vmem:[#allocation11 + $0x340] sm:$0xff]
    %v1702 = vld [vmem:[#allocation11 + $0x348] sm:$0xff]
    %v1703 = vld [vmem:[#allocation11 + $0x350] sm:$0xff]
    %v1704 = vld [vmem:[#allocation11 + $0x358] sm:$0xff]
    %v1705 = vld [vmem:[#allocation11 + $0x360] sm:$0xff]
    %v1706 = vld [vmem:[#allocation11 + $0x368] sm:$0xff]
    %v1707 = vld [vmem:[#allocation11 + $0x370] sm:$0xff]
    %v1708 = vld [vmem:[#allocation11 + $0x378] sm:$0xff]
    %v1709 = vld [vmem:[#allocation11 + $0x380] sm:$0xff]
    %v1710 = vld [vmem:[#allocation11 + $0x388] sm:$0xff]
    %v1711 = vld [vmem:[#allocation11 + $0x390] sm:$0xff]
    %v1712 = vld [vmem:[#allocation11 + $0x398] sm:$0xff]
    %v1713 = vld [vmem:[#allocation11 + $0x3a0] sm:$0xff]
    %v1714 = vld [vmem:[#allocation11 + $0x3a8] sm:$0xff]
    %v1715 = vld [vmem:[#allocation11 + $0x3b0] sm:$0xff]
    %v1716 = vld [vmem:[#allocation11 + $0x3b8] sm:$0xff]
    %v1717 = vld [vmem:[#allocation11 + $0x3c0] sm:$0xff]
    %v1718 = vld [vmem:[#allocation11 + $0x3c8] sm:$0xff]
    %v1719 = vld [vmem:[#allocation11 + $0x3d0] sm:$0xff]
    %v1720 = vld [vmem:[#allocation11 + $0x3d8] sm:$0xff]
    %v1721 = vld [vmem:[#allocation11 + $0x3e0] sm:$0xff]
    %v1722 = vld [vmem:[#allocation11 + $0x3e8] sm:$0xff]
    %v1723 = vld [vmem:[#allocation11 + $0x3f0] sm:$0xff]
    %v1724 = vld [vmem:[#allocation11 + $0x3f8] sm:$0xff]
    %v1725 = vld [vmem:[#allocation13] sm:$0x3]
    %v1727 = vlaneseq
    %v1728 = vshrl.u32 %v1727, 7
    %v1729 = vsub.s32 0, %v1728
    %v1730 = vrot.slane %v1725, %v1729
    %v1731 = vlaneseq
    %v1732 = vshrl.u32 %v1731, 7
    %v1733 = vsub.s32 1, %v1732
    %v1734 = vrot.slane %v1725, %v1733
    %1737 = vmatprep.subr.mxu0 %v1628
    %1738 = vmatpush1.msra.mxu0 %v1627
    %1739 = vmatprep.subr.mxu0 %v1626
    %1740 = vmatpush1.msra.mxu0 %v1625
    %1741 = vmatprep.subr.mxu0 %v1624
    %1742 = vmatpush1.msra.mxu0 %v1623
    %1743 = vmatprep.subr.mxu0 %v1622
    %1744 = vmatpush1.msra.mxu0 %v1621
    %1745 = vmatprep.subr.mxu0 %v1620
    %1746 = vmatpush1.msra.mxu0 %v1619
    %1747 = vmatprep.subr.mxu0 %v1618
    %1748 = vmatpush1.msra.mxu0 %v1617
    %1749 = vmatprep.subr.mxu0 %v1616
    %1750 = vmatpush1.msra.mxu0 %v1615
    %1751 = vmatprep.subr.mxu0 %v1614
    %1752 = vmatpush1.msra.mxu0 %v1613
    %1753 = vmatprep.subr.mxu0 %v1612
    %1754 = vmatpush1.msra.mxu0 %v1611
    %1755 = vmatprep.subr.mxu0 %v1610
    %1756 = vmatpush1.msra.mxu0 %v1609
    %1757 = vmatprep.subr.mxu0 %v1608
    %1758 = vmatpush1.msra.mxu0 %v1607
    %1759 = vmatprep.subr.mxu0 %v1606
    %1760 = vmatpush1.msra.mxu0 %v1605
    %1761 = vmatprep.subr.mxu0 %v1604
    %1762 = vmatpush1.msra.mxu0 %v1603
    %1763 = vmatprep.subr.mxu0 %v1602
    %1764 = vmatpush1.msra.mxu0 %v1601
    %1765 = vmatprep.subr.mxu0 %v1600
    %1766 = vmatpush1.msra.mxu0 %v1599
    %1767 = vmatprep.subr.mxu0 %v1598
    %1768 = vmatpush1.msra.mxu0 %v1597
    %1769 = vmatprep.subr.mxu0 %v1660
    %1770 = vmatpush2.msra.mxu0 %v1659
    %1771 = vmatprep.subr.mxu0 %v1658
    %1772 = vmatpush2.msra.mxu0 %v1657
    %1773 = vmatprep.subr.mxu0 %v1656
    %1774 = vmatpush2.msra.mxu0 %v1655
    %1775 = vmatprep.subr.mxu0 %v1654
    %1776 = vmatpush2.msra.mxu0 %v1653
    %1777 = vmatprep.subr.mxu0 %v1652
    %1778 = vmatpush2.msra.mxu0 %v1651
    %1779 = vmatprep.subr.mxu0 %v1650
    %1780 = vmatpush2.msra.mxu0 %v1649
    %1781 = vmatprep.subr.mxu0 %v1648
    %1782 = vmatpush2.msra.mxu0 %v1647
    %1783 = vmatprep.subr.mxu0 %v1646
    %1784 = vmatpush2.msra.mxu0 %v1645
    %1785 = vmatprep.subr.mxu0 %v1644
    %1786 = vmatpush2.msra.mxu0 %v1643
    %1787 = vmatprep.subr.mxu0 %v1642
    %1788 = vmatpush2.msra.mxu0 %v1641
    %1789 = vmatprep.subr.mxu0 %v1640
    %1790 = vmatpush2.msra.mxu0 %v1639
    %1791 = vmatprep.subr.mxu0 %v1638
    %1792 = vmatpush2.msra.mxu0 %v1637
    %1793 = vmatprep.subr.mxu0 %v1636
    %1794 = vmatpush2.msra.mxu0 %v1635
    %1795 = vmatprep.subr.mxu0 %v1634
    %1796 = vmatpush2.msra.mxu0 %v1633
    %1797 = vmatprep.subr.mxu0 %v1632
    %1798 = vmatpush2.msra.mxu0 %v1631
    %1799 = vmatprep.subr.mxu0 %v1630
    %1800 = vmatpush2.msra.mxu0 %v1629
    %1801 = vmatprep.mubr.f32.mxu0 %v1594
    %1802 = vmatmul.mubr.f32.gmra.mxu0 %v1593
    %v1803 = vpop.f32.mrf.mxu0
    %v1804 = vadd.f32 %v1730, %v1803
    %v1805 = vpop.f32.mrf.mxu0
    %v1806 = vadd.f32 %v1734, %v1805
    %1807 = vdwg.mxu0
    %1808 = vmatprep.subr.mxu0 %v1692
    %1809 = vmatpush1.msra.mxu0 %v1691
    %1810 = vmatprep.subr.mxu0 %v1690
    %1811 = vmatpush1.msra.mxu0 %v1689
    %1812 = vmatprep.subr.mxu0 %v1688
    %1813 = vmatpush1.msra.mxu0 %v1687
    %1814 = vmatprep.subr.mxu0 %v1686
    %1815 = vmatpush1.msra.mxu0 %v1685
    %1816 = vmatprep.subr.mxu0 %v1684
    %1817 = vmatpush1.msra.mxu0 %v1683
    %1818 = vmatprep.subr.mxu0 %v1682
    %1819 = vmatpush1.msra.mxu0 %v1681
    %1820 = vmatprep.subr.mxu0 %v1680
    %1821 = vmatpush1.msra.mxu0 %v1679
    %1822 = vmatprep.subr.mxu0 %v1678
    %1823 = vmatpush1.msra.mxu0 %v1677
    %1824 = vmatprep.subr.mxu0 %v1676
    %1825 = vmatpush1.msra.mxu0 %v1675
    %1826 = vmatprep.subr.mxu0 %v1674
    %1827 = vmatpush1.msra.mxu0 %v1673
    %1828 = vmatprep.subr.mxu0 %v1672
    %1829 = vmatpush1.msra.mxu0 %v1671
    %1830 = vmatprep.subr.mxu0 %v1670
    %1831 = vmatpush1.msra.mxu0 %v1669
    %1832 = vmatprep.subr.mxu0 %v1668
    %1833 = vmatpush1.msra.mxu0 %v1667
    %1834 = vmatprep.subr.mxu0 %v1666
    %1835 = vmatpush1.msra.mxu0 %v1665
    %1836 = vmatprep.subr.mxu0 %v1664
    %1837 = vmatpush1.msra.mxu0 %v1663
    %1838 = vmatprep.subr.mxu0 %v1662
    %1839 = vmatpush1.msra.mxu0 %v1661
    %1840 = vmatprep.subr.mxu0 %v1724
    %1841 = vmatpush2.msra.mxu0 %v1723
    %1842 = vmatprep.subr.mxu0 %v1722
    %1843 = vmatpush2.msra.mxu0 %v1721
    %1844 = vmatprep.subr.mxu0 %v1720
    %1845 = vmatpush2.msra.mxu0 %v1719
    %1846 = vmatprep.subr.mxu0 %v1718
    %1847 = vmatpush2.msra.mxu0 %v1717
    %1848 = vmatprep.subr.mxu0 %v1716
    %1849 = vmatpush2.msra.mxu0 %v1715
    %1850 = vmatprep.subr.mxu0 %v1714
    %1851 = vmatpush2.msra.mxu0 %v1713
    %1852 = vmatprep.subr.mxu0 %v1712
    %1853 = vmatpush2.msra.mxu0 %v1711
    %1854 = vmatprep.subr.mxu0 %v1710
    %1855 = vmatpush2.msra.mxu0 %v1709
    %1856 = vmatprep.subr.mxu0 %v1708
    %1857 = vmatpush2.msra.mxu0 %v1707
    %1858 = vmatprep.subr.mxu0 %v1706
    %1859 = vmatpush2.msra.mxu0 %v1705
    %1860 = vmatprep.subr.mxu0 %v1704
    %1861 = vmatpush2.msra.mxu0 %v1703
    %1862 = vmatprep.subr.mxu0 %v1702
    %1863 = vmatpush2.msra.mxu0 %v1701
    %1864 = vmatprep.subr.mxu0 %v1700
    %1865 = vmatpush2.msra.mxu0 %v1699
    %1866 = vmatprep.subr.mxu0 %v1698
    %1867 = vmatpush2.msra.mxu0 %v1697
    %1868 = vmatprep.subr.mxu0 %v1696
    %1869 = vmatpush2.msra.mxu0 %v1695
    %1870 = vmatprep.subr.mxu0 %v1694
    %1871 = vmatpush2.msra.mxu0 %v1693
    %1872 = vmatprep.mubr.f32.mxu0 %v1596
    %1873 = vmatmul.mubr.f32.gmra.mxu0 %v1595
    %v1874 = vpop.f32.mrf.mxu0
    %v1875 = vadd.f32 %v1804, %v1874
    %v1876 = vpop.f32.mrf.mxu0
    %v1877 = vadd.f32 %v1806, %v1876
    %1878 = vdwg.mxu0
    %v1879 = vmax.f32 %v1875, 0.0
    %v1880 = vmax.f32 %v1877, 0.0
    %v1881 = vld [vmem:[%s7] sm:$0xff]
    %v1882 = vld [vmem:[%s7 + $0x8] sm:$0xff]
    %v1883 = vld [vmem:[%s7 + $0x10] sm:$0xff]
    %v1884 = vld [vmem:[%s7 + $0x18] sm:$0xff]
    %v1885 = vld [vmem:[%s7 + $0x20] sm:$0xff]
    %v1886 = vld [vmem:[%s7 + $0x28] sm:$0xff]
    %v1887 = vld [vmem:[%s7 + $0x30] sm:$0xff]
    %v1888 = vld [vmem:[%s7 + $0x38] sm:$0xff]
    %v1889 = vld [vmem:[%s7 + $0x40] sm:$0xff]
    %v1890 = vld [vmem:[%s7 + $0x48] sm:$0xff]
    %v1891 = vld [vmem:[%s7 + $0x50] sm:$0xff]
    %v1892 = vld [vmem:[%s7 + $0x58] sm:$0xff]
    %v1893 = vld [vmem:[%s7 + $0x60] sm:$0xff]
    %v1894 = vld [vmem:[%s7 + $0x68] sm:$0xff]
    %v1895 = vld [vmem:[%s7 + $0x70] sm:$0xff]
    %v1896 = vld [vmem:[%s7 + $0x78] sm:$0xff]
    %v1897 = vld [vmem:[%s7 + $0x80] sm:$0xff]
    %v1898 = vld [vmem:[%s7 + $0x88] sm:$0xff]
    %v1899 = vld [vmem:[%s7 + $0x90] sm:$0xff]
    %v1900 = vld [vmem:[%s7 + $0x98] sm:$0xff]
    %v1901 = vld [vmem:[%s7 + $0xa0] sm:$0xff]
    %v1902 = vld [vmem:[%s7 + $0xa8] sm:$0xff]
    %v1903 = vld [vmem:[%s7 + $0xb0] sm:$0xff]
    %v1904 = vld [vmem:[%s7 + $0xb8] sm:$0xff]
    %v1905 = vld [vmem:[%s7 + $0xc0] sm:$0xff]
    %v1906 = vld [vmem:[%s7 + $0xc8] sm:$0xff]
    %v1907 = vld [vmem:[%s7 + $0xd0] sm:$0xff]
    %v1908 = vld [vmem:[%s7 + $0xd8] sm:$0xff]
    %v1909 = vld [vmem:[%s7 + $0xe0] sm:$0xff]
    %v1910 = vld [vmem:[%s7 + $0xe8] sm:$0xff]
    %v1911 = vld [vmem:[%s7 + $0xf0] sm:$0xff]
    %v1912 = vld [vmem:[%s7 + $0xf8] sm:$0xff]
    %v1913 = vld [vmem:[%s8] sm:$0x1]
    %v1915 = vlaneseq
    %v1916 = vshrl.u32 %v1915, 7
    %v1917 = vsub.s32 0, %v1916
    %v1918 = vrot.slane %v1913, %v1917
    %1920 = vmatprep.subr.mxu0 0.0
    %1921 = vmatpush1.msra.mxu0 %v1896
    %1922 = vmatprep.subr.mxu0 0.0
    %1923 = vmatpush1.msra.mxu0 %v1895
    %1924 = vmatprep.subr.mxu0 0.0
    %1925 = vmatpush1.msra.mxu0 %v1894
    %1926 = vmatprep.subr.mxu0 0.0
    %1927 = vmatpush1.msra.mxu0 %v1893
    %1928 = vmatprep.subr.mxu0 0.0
    %1929 = vmatpush1.msra.mxu0 %v1892
    %1930 = vmatprep.subr.mxu0 0.0
    %1931 = vmatpush1.msra.mxu0 %v1891
    %1932 = vmatprep.subr.mxu0 0.0
    %1933 = vmatpush1.msra.mxu0 %v1890
    %1934 = vmatprep.subr.mxu0 0.0
    %1935 = vmatpush1.msra.mxu0 %v1889
    %1936 = vmatprep.subr.mxu0 0.0
    %1937 = vmatpush1.msra.mxu0 %v1888
    %1938 = vmatprep.subr.mxu0 0.0
    %1939 = vmatpush1.msra.mxu0 %v1887
    %1940 = vmatprep.subr.mxu0 0.0
    %1941 = vmatpush1.msra.mxu0 %v1886
    %1942 = vmatprep.subr.mxu0 0.0
    %1943 = vmatpush1.msra.mxu0 %v1885
    %1944 = vmatprep.subr.mxu0 0.0
    %1945 = vmatpush1.msra.mxu0 %v1884
    %1946 = vmatprep.subr.mxu0 0.0
    %1947 = vmatpush1.msra.mxu0 %v1883
    %1948 = vmatprep.subr.mxu0 0.0
    %1949 = vmatpush1.msra.mxu0 %v1882
    %1950 = vmatprep.subr.mxu0 0.0
    %1951 = vmatpush1.msra.mxu0 %v1881
    %1952 = vmatprep.subr.mxu0 0.0
    %1953 = vmatpush2.msra.mxu0 %v1912
    %1954 = vmatprep.subr.mxu0 0.0
    %1955 = vmatpush2.msra.mxu0 %v1911
    %1956 = vmatprep.subr.mxu0 0.0
    %1957 = vmatpush2.msra.mxu0 %v1910
    %1958 = vmatprep.subr.mxu0 0.0
    %1959 = vmatpush2.msra.mxu0 %v1909
    %1960 = vmatprep.subr.mxu0 0.0
    %1961 = vmatpush2.msra.mxu0 %v1908
    %1962 = vmatprep.subr.mxu0 0.0
    %1963 = vmatpush2.msra.mxu0 %v1907
    %1964 = vmatprep.subr.mxu0 0.0
    %1965 = vmatpush2.msra.mxu0 %v1906
    %1966 = vmatprep.subr.mxu0 0.0
    %1967 = vmatpush2.msra.mxu0 %v1905
    %1968 = vmatprep.subr.mxu0 0.0
    %1969 = vmatpush2.msra.mxu0 %v1904
    %1970 = vmatprep.subr.mxu0 0.0
    %1971 = vmatpush2.msra.mxu0 %v1903
    %1972 = vmatprep.subr.mxu0 0.0
    %1973 = vmatpush2.msra.mxu0 %v1902
    %1974 = vmatprep.subr.mxu0 0.0
    %1975 = vmatpush2.msra.mxu0 %v1901
    %1976 = vmatprep.subr.mxu0 0.0
    %1977 = vmatpush2.msra.mxu0 %v1900
    %1978 = vmatprep.subr.mxu0 0.0
    %1979 = vmatpush2.msra.mxu0 %v1899
    %1980 = vmatprep.subr.mxu0 0.0
    %1981 = vmatpush2.msra.mxu0 %v1898
    %1982 = vmatprep.subr.mxu0 0.0
    %1983 = vmatpush2.msra.mxu0 %v1897
    %1984 = vmatprep.mubr.f32.mxu0 %v1880
    %1985 = vmatmul.mubr.f32.gmra.mxu0 %v1879
    %v1986 = vpop.f32.mrf.mxu0
    %v1987 = vadd.f32 %v1918, %v1986
    %v1988 = vpop.f32.mrf.mxu0
    %1989 = vdwg.mxu0
    %1990 = vst [vmem:[#allocation14] sm:$0xff] %v1987
    // Predicated region
    $region66: #{multitask1_forward.1} parent=1 // pred_check
      _
    $region67: #{multitask1_forward.1} parent=1 // pred_check_branch
      %1992 = sbr.rel (0) target = $region69
    $region68: #{multitask1_forward.1} parent=1 // pred_region
      %s1994 = ssub.s32 128, 128
      %1995 = vsyncadd [#allocation4], %s1994
      %s1997 = sshll.u32 [#allocation14], 4
      %s1998 = int_to_ptr.vmem [resolvable:$true] %s1997
      %2000 = dma.vmem_to_hbm [thread:$0]  %s1998, 128, %s9, [#allocation4]
    $region69: #{multitask1_forward.1} parent=1 // pred_fallthru
      _
    // Predicated region
    $region70: #{multitask1_forward.1} parent=1 // pred_check
      _
    $region71: #{multitask1_forward.1} parent=1 // pred_check_branch
      %2002 = sbr.rel (0) target = $region73
    $region72: #{multitask1_forward.1} parent=1 // pred_region
      %2003 = dma.done [#allocation4], 128
    $region73: #{multitask1_forward.1} parent=1 // pred_fallthru
      _
    %2004 = vsyncpa [#allocation3], 1
    %2005 = vsyncpa [#allocation6], 1
    %2006 = vsyncpa [#allocation9], 1
    %2007 = vsyncpa [#allocation12], 1
    %2008 = vsyncpa [#allocation4], 1

</llo_original>
